<compile_context>
chip_gen: v6e
topology: v6e:2x2x1
jax: 0.10.0
libtpu: 0.0.40
codegen_flags: <defaults>
</compile_context>

<pallas_src>
import functools
from typing import NamedTuple

import jax
import jax.numpy as jnp
from jax.experimental import pallas as pl
from jax.experimental.pallas import tpu as pltpu


MATMUL_DTYPE = jnp.bfloat16   # MXU input dtype; accumulation/epilogue stay f32
_LANE = 128                   # lane width
_SUBLANE = 16                 # bf16 sublane packing granule (one vreg = [16,128])
_MAX_BATCH_TILE = 128         # <=128 so grid>=2 engages both v7x TCs early


def _round_up(n, m):
    return ((n + m - 1) // m) * m


def _batch_tiling(batch):
    """Pad batch only to the 16-row granule; pick the largest 16-multiple tile
    (<=128) that divides the padded batch, so there is no tile-size padding cliff."""
    b_pad = _round_up(max(batch, 1), _SUBLANE)
    if b_pad <= _MAX_BATCH_TILE:
        return b_pad, b_pad
    for cand in range(_MAX_BATCH_TILE, 0, -_SUBLANE):
        if b_pad % cand == 0:
            return b_pad, cand
    return b_pad, _SUBLANE  # unreachable: 16 always divides b_pad


class Dims(NamedTuple):
    D: int
    E: int
    P: int
    D_pad: int
    H_pad: int
    E_pad: int
    P_pad: int


# ----------------------------- fused Pallas kernel -----------------------------

def _protonet_kernel(x_ref, w1_ref, b1_ref, w2_ref, b2_ref, pt_ref, pn_ref,
                     emb_ref, dist_ref):
    # Activation arrives in f32; cast to bf16 on-chip (no wrapper-side cast pass).
    x = x_ref[...].astype(w1_ref.dtype)

    # Encoder layer 1: ReLU(x @ w1 + b1). bf16 MXU inputs, f32 accumulation.
    h = jnp.dot(x, w1_ref[...], preferred_element_type=jnp.float32)
    h = jnp.maximum(h + b1_ref[...], 0.0)

    # Encoder layer 2: embeddings = h @ w2 + b2 (epilogue in f32).
    e = jnp.dot(h.astype(w2_ref.dtype), w2_ref[...],
                preferred_element_type=jnp.float32)
    e = e + b2_ref[...]
    emb_ref[...] = e.astype(emb_ref.dtype)

    # Negative L2 distance to prototypes via Gram expansion; the cross term runs on
    # the MXU, and ||e||^2 uses the same bf16-rounded e the MXU sees (consistent
    # cancellation).  ||p||^2 was precomputed from the bf16-rounded prototypes.
    e_bf = e.astype(pt_ref.dtype)
    cross = jnp.dot(e_bf, pt_ref[...], preferred_element_type=jnp.float32)  # [bt,P]
    e_sq = jnp.sum(jnp.square(e_bf.astype(jnp.float32)), axis=-1,
                   keepdims=True)                                           # [bt,1]
    sq = jnp.maximum(e_sq + pn_ref[...] - 2.0 * cross, 0.0)  # clamp before sqrt
    dist_ref[...] = (-jnp.sqrt(sq)).astype(dist_ref.dtype)


# ----------------------------- wrapper -----------------------------

def preprocess_params(params):
    """Pad / cast the loop-invariant operands ONCE (cache the result; do not call
    per forward step).  Returns (consts_tuple, dims)."""
    w1 = jnp.asarray(params["w1"], jnp.float32)
    b1 = jnp.asarray(params["b1"], jnp.float32)
    w2 = jnp.asarray(params["w2"], jnp.float32)
    b2 = jnp.asarray(params["b2"], jnp.float32)
    pt = jnp.asarray(params["prototypes"], jnp.float32)

    D, H = w1.shape
    E = w2.shape[1]
    P = pt.shape[0]
    D_pad = _round_up(D, _LANE)
    H_pad = _round_up(H, _LANE)
    E_pad = _round_up(E, _LANE)
    P_pad = _round_up(P, _LANE)

    w1_p = jnp.pad(w1, ((0, D_pad - D), (0, H_pad - H))).astype(MATMUL_DTYPE)
    b1_p = jnp.pad(b1, (0, H_pad - H)).reshape(1, H_pad).astype(jnp.float32)
    w2_p = jnp.pad(w2, ((0, H_pad - H), (0, E_pad - E))).astype(MATMUL_DTYPE)
    b2_p = jnp.pad(b2, (0, E_pad - E)).reshape(1, E_pad).astype(jnp.float32)

    pt_bf = jnp.pad(pt, ((0, P_pad - P), (0, E_pad - E))).astype(MATMUL_DTYPE)
    pt_t = pt_bf.T                                                # [E_pad, P_pad] bf16
    # ||p||^2 from the same bf16-rounded prototypes the MXU cross term will see.
    pn = jnp.sum(jnp.square(pt_bf.astype(jnp.float32)), axis=1).reshape(1, P_pad)

    consts = (w1_p, b1_p, w2_p, b2_p, pt_t, pn)
    dims = Dims(D=D, E=E, P=P, D_pad=D_pad, H_pad=H_pad, E_pad=E_pad, P_pad=P_pad)
    return consts, dims


@functools.partial(jax.jit, static_argnames=("dims", "single_buffer_weights"))
def protonet_forward(x, w1_p, b1_p, w2_p, b2_p, pt_t, pn, *, dims,
                     single_buffer_weights=True):
    """Mirrors ProtoNet.forward: returns (embeddings [B,E], dists [B,P])."""
    B = x.shape[0]
    x_flat = x.reshape(B, -1).astype(jnp.float32)        # glue: flatten NCHW
    D = x_flat.shape[1]
    assert D == dims.D, "input feature size does not match the encoder"

    B_pad, bt = _batch_tiling(B)
    if B_pad != B or dims.D_pad != D:
        x_flat = jnp.pad(x_flat, ((0, B_pad - B), (0, dims.D_pad - D)))

    grid = (B_pad // bt,)

    # Loop-invariant operands: single-buffer if supported (index never changes).
    const_kw = dict(pipeline_mode=pl.Buffered(1)) if single_buffer_weights else {}
    in_specs = [
        pl.BlockSpec((bt, dims.D_pad), lambda i: (i, 0)),                  # x (tiled)
        pl.BlockSpec((dims.D_pad, dims.H_pad), lambda i: (0, 0), **const_kw),  # w1
        pl.BlockSpec((1, dims.H_pad), lambda i: (0, 0), **const_kw),           # b1
        pl.BlockSpec((dims.H_pad, dims.E_pad), lambda i: (0, 0), **const_kw),  # w2
        pl.BlockSpec((1, dims.E_pad), lambda i: (0, 0), **const_kw),           # b2
        pl.BlockSpec((dims.E_pad, dims.P_pad), lambda i: (0, 0), **const_kw),  # p^T
        pl.BlockSpec((1, dims.P_pad), lambda i: (0, 0), **const_kw),           # ||p||^2
    ]
    out_specs = (
        pl.BlockSpec((bt, dims.E_pad), lambda i: (i, 0)),
        pl.BlockSpec((bt, dims.P_pad), lambda i: (i, 0)),
    )

    # Explicit scoped-VMEM budget (v5e default is only 16 MiB; v7x physical 64 MiB).
    weight_bytes = ((w1_p.size + w2_p.size + pt_t.size) * 2
                    + (b1_p.size + b2_p.size + pn.size) * 4)
    wbuf = 1 if single_buffer_weights else 2
    io_bytes = 2 * bt * (dims.D_pad + dims.E_pad + dims.P_pad) * 4
    live_bytes = bt * (dims.H_pad + dims.E_pad + dims.P_pad) * 4
    vmem_limit = int(min(64 << 20,
                         max(16 << 20,
                             2 * (wbuf * weight_bytes + io_bytes + live_bytes))))

    flops = 2 * B_pad * (dims.D_pad * dims.H_pad
                         + dims.H_pad * dims.E_pad
                         + dims.E_pad * dims.P_pad)
    bytes_accessed = (B_pad * dims.D_pad * 4
                      + weight_bytes
                      + (B_pad * dims.E_pad + B_pad * dims.P_pad) * 4)

    emb_p, dist_p = pl.pallas_call(
        _protonet_kernel,
        out_shape=(jax.ShapeDtypeStruct((B_pad, dims.E_pad), jnp.float32),
                   jax.ShapeDtypeStruct((B_pad, dims.P_pad), jnp.float32)),
        grid=grid,
        in_specs=in_specs,
        out_specs=out_specs,
        compiler_params=pltpu.CompilerParams(
            dimension_semantics=("parallel",),
            vmem_limit_bytes=vmem_limit),
        cost_estimate=pl.CostEstimate(
            flops=flops, transcendentals=B_pad * dims.P_pad,
            bytes_accessed=bytes_accessed),
    )(x_flat, w1_p, b1_p, w2_p, b2_p, pt_t, pn)

    # Slice only when padding was actually applied.
    emb = emb_p if (B_pad == B and dims.E_pad == dims.E) else emb_p[:B, :dims.E]
    dist = dist_p if (B_pad == B and dims.P_pad == dims.P) else dist_p[:B, :dims.P]
    return emb, dist


# ----------------------------- params -----------------------------

def init_params(key, in_dim, hidden, emb, n_protos):
    k1, k2, k3, k4, k5 = jax.random.split(key, 5)
    return {
        # encoder: Linear(in_dim, hidden) + ReLU, Linear(hidden, emb)
        "w1": jax.random.normal(k1, (in_dim, hidden), jnp.float32) * 0.05,
        "b1": jax.random.normal(k2, (hidden,), jnp.float32) * 0.01,
        "w2": jax.random.normal(k3, (hidden, emb), jnp.float32) * 0.05,
        "b2": jax.random.normal(k4, (emb,), jnp.float32) * 0.01,
        # prototypes ~ torch.rand((n_protos, output_size)) -> uniform [0, 1)
        "prototypes": jax.random.uniform(k5, (n_protos, emb), jnp.float32),
    }


# ----------------------------- main -----------------------------

if __name__ == "__main__":
    key = jax.random.PRNGKey(0)
    kx, kp = jax.random.split(key)

    # small shapes: batch=2, channels=4, spatial=16x16, hidden=64, emb=32, 8 protos
    B, C, Hs, Ws = 2, 4, 16, 16
    HIDDEN, EMB, N_PROTOS = 64, 32, 8

    x = jax.random.normal(kx, (B, C, Hs, Ws), jnp.float32)   # NCHW, like PyTorch
    params = init_params(kp, C * Hs * Ws, HIDDEN, EMB, N_PROTOS)

    # One-time preprocessing of loop-invariant operands (cached across steps).
    consts, dims = preprocess_params(params)
    jax.block_until_ready(consts)

    try:
        embeddings, dists = protonet_forward(x, *consts, dims=dims,
                                             single_buffer_weights=True)
        jax.block_until_ready((embeddings, dists))
    except Exception:
        # pl.Buffered(1) not supported by this jax/libtpu: fall back to defaults.
        embeddings, dists = protonet_forward(x, *consts, dims=dims,
                                             single_buffer_weights=False)
        jax.block_until_ready((embeddings, dists))

    # shape / sign sanity (torch semantics)
    assert embeddings.shape == (B, EMB)
    assert dists.shape == (B, N_PROTOS)
    assert bool(jnp.all(dists <= 0.0))                   # negative norms

    x_flat = x.reshape(B, -1)

    # Reference 1: same-math path (bf16 MXU inputs, f32 accumulation/epilogue,
    # distances from the same bf16-rounded e / prototypes the kernel uses).
    xb = x_flat.astype(MATMUL_DTYPE)
    w1b = params["w1"].astype(MATMUL_DTYPE)
    w2b = params["w2"].astype(MATMUL_DTYPE)
    h_bf = jnp.maximum(
        jnp.dot(xb, w1b, preferred_element_type=jnp.float32) + params["b1"], 0.0)
    e_bf = jnp.dot(h_bf.astype(MATMUL_DTYPE), w2b,
                   preferred_element_type=jnp.float32) + params["b2"]
    e_q = e_bf.astype(MATMUL_DTYPE)
    pt_q = params["prototypes"].astype(MATMUL_DTYPE)
    cross = jnp.dot(e_q, pt_q.T, preferred_element_type=jnp.float32)
    e_sq = jnp.sum(e_q.astype(jnp.float32) ** 2, -1, keepdims=True)
    p_sq = jnp.sum(pt_q.astype(jnp.float32) ** 2, -1)[None, :]
    d_bf = -jnp.sqrt(jnp.maximum(e_sq + p_sq - 2.0 * cross, 0.0))
    assert jnp.allclose(embeddings, e_bf, atol=5e-3, rtol=5e-3)
    assert jnp.allclose(dists, d_bf, atol=5e-3, rtol=5e-3)

    # Reference 2: full-f32 reference of the original module semantics.
    h_ref = jnp.maximum(x_flat @ params["w1"] + params["b1"], 0.0)
    e_ref = h_ref @ params["w2"] + params["b2"]
    d_ref = -jnp.linalg.norm(e_ref[:, None, :] - params["prototypes"][None, :, :],
                             axis=-1)
    assert jnp.allclose(embeddings, e_ref, atol=5e-2, rtol=5e-2)
    assert jnp.allclose(dists, d_ref, atol=5e-2, rtol=5e-2)

    print("KERNEL_OK")
</pallas_src>

<mosaic_0001>
module attributes {stable_mosaic.version = 11 : i64} {
  func.func @_protonet_kernel(%arg0: i32, %arg1: memref<16x1024xf32, #tpu.memory_space<vmem>>, %arg2: memref<1024x128xbf16, #tpu.memory_space<vmem>>, %arg3: memref<1x128xf32, #tpu.memory_space<vmem>>, %arg4: memref<128x128xbf16, #tpu.memory_space<vmem>>, %arg5: memref<1x128xf32, #tpu.memory_space<vmem>>, %arg6: memref<128x128xbf16, #tpu.memory_space<vmem>>, %arg7: memref<1x128xf32, #tpu.memory_space<vmem>>, %arg8: memref<16x128xf32, #tpu.memory_space<vmem>>, %arg9: memref<16x128xf32, #tpu.memory_space<vmem>>) attributes {dimension_semantics = [#tpu.dimension_semantics<parallel>], iteration_bounds = array<i64: 1>, scalar_prefetch = 0 : i64, scratch_operands = 0 : i64, tpu.core_type = #tpu.core_type<tc>, window_params = [{transform_indices = @transform_0, window_bounds = array<i64: 16, 1024>}, {pipeline_mode = #tpu.pipeline_mode<synchronous>, transform_indices = @transform_1, window_bounds = array<i64: 1024, 128>}, {pipeline_mode = #tpu.pipeline_mode<synchronous>, transform_indices = @transform_2, window_bounds = array<i64: 1, 128>}, {pipeline_mode = #tpu.pipeline_mode<synchronous>, transform_indices = @transform_3, window_bounds = array<i64: 128, 128>}, {pipeline_mode = #tpu.pipeline_mode<synchronous>, transform_indices = @transform_4, window_bounds = array<i64: 1, 128>}, {pipeline_mode = #tpu.pipeline_mode<synchronous>, transform_indices = @transform_5, window_bounds = array<i64: 128, 128>}, {pipeline_mode = #tpu.pipeline_mode<synchronous>, transform_indices = @transform_6, window_bounds = array<i64: 1, 128>}, {transform_indices = @transform_7, window_bounds = array<i64: 16, 128>}, {transform_indices = @transform_8, window_bounds = array<i64: 16, 128>}]} {
    %c0 = arith.constant 0 : index
    %c0_0 = arith.constant 0 : index
    %0 = vector.load %arg1[%c0, %c0_0] : memref<16x1024xf32, #tpu.memory_space<vmem>>, vector<16x1024xf32>
    %1 = arith.truncf %0 : vector<16x1024xf32> to vector<16x1024xbf16>
    %c0_1 = arith.constant 0 : index
    %c0_2 = arith.constant 0 : index
    %2 = vector.load %arg2[%c0_1, %c0_2] : memref<1024x128xbf16, #tpu.memory_space<vmem>>, vector<1024x128xbf16>
    %cst = arith.constant dense<0.000000e+00> : vector<16x128xf32>
    %3 = tpu.matmul %1, %2, %cst {dimension_numbers = #tpu.dot_dimension_numbers<[1], [0], [0], [1], [0, 0, 1, 1], [], []>} : vector<16x1024xbf16>, vector<1024x128xbf16>, vector<16x128xf32> -> vector<16x128xf32>
    %c0_3 = arith.constant 0 : index
    %c0_4 = arith.constant 0 : index
    %4 = vector.load %arg3[%c0_3, %c0_4] : memref<1x128xf32, #tpu.memory_space<vmem>>, vector<1x128xf32>
    %5 = vector.broadcast %4 : vector<1x128xf32> to vector<16x128xf32>
    %6 = arith.addf %3, %5 : vector<16x128xf32>
    %cst_5 = arith.constant 0.000000e+00 : f32
    %7 = vector.broadcast %cst_5 : f32 to vector<16x128xf32>
    %8 = arith.maximumf %6, %7 : vector<16x128xf32>
    %9 = arith.truncf %8 : vector<16x128xf32> to vector<16x128xbf16>
    %c0_6 = arith.constant 0 : index
    %c0_7 = arith.constant 0 : index
    %10 = vector.load %arg4[%c0_6, %c0_7] : memref<128x128xbf16, #tpu.memory_space<vmem>>, vector<128x128xbf16>
    %cst_8 = arith.constant dense<0.000000e+00> : vector<16x128xf32>
    %11 = tpu.matmul %9, %10, %cst_8 {dimension_numbers = #tpu.dot_dimension_numbers<[1], [0], [0], [1], [0, 0, 1, 1], [], []>} : vector<16x128xbf16>, vector<128x128xbf16>, vector<16x128xf32> -> vector<16x128xf32>
    %c0_9 = arith.constant 0 : index
    %c0_10 = arith.constant 0 : index
    %12 = vector.load %arg5[%c0_9, %c0_10] : memref<1x128xf32, #tpu.memory_space<vmem>>, vector<1x128xf32>
    %13 = vector.broadcast %12 : vector<1x128xf32> to vector<16x128xf32>
    %14 = arith.addf %11, %13 : vector<16x128xf32>
    %c0_11 = arith.constant 0 : index
    %c0_12 = arith.constant 0 : index
    %15 = vector.load %arg8[%c0_11, %c0_12] : memref<16x128xf32, #tpu.memory_space<vmem>>, vector<16x128xf32>
    tpu.vector_store %arg8[%c0_11, %c0_12], %14 {strides = array<i32>} : memref<16x128xf32, #tpu.memory_space<vmem>>, vector<16x128xf32>,
    %16 = arith.truncf %14 : vector<16x128xf32> to vector<16x128xbf16>
    %c0_13 = arith.constant 0 : index
    %c0_14 = arith.constant 0 : index
    %17 = vector.load %arg6[%c0_13, %c0_14] : memref<128x128xbf16, #tpu.memory_space<vmem>>, vector<128x128xbf16>
    %cst_15 = arith.constant dense<0.000000e+00> : vector<16x128xf32>
    %18 = tpu.matmul %16, %17, %cst_15 {dimension_numbers = #tpu.dot_dimension_numbers<[1], [0], [0], [1], [0, 0, 1, 1], [], []>} : vector<16x128xbf16>, vector<128x128xbf16>, vector<16x128xf32> -> vector<16x128xf32>
    %19 = arith.extf %16 : vector<16x128xbf16> to vector<16x128xf32>
    %20 = arith.mulf %19, %19 : vector<16x128xf32>
    %cst_16 = arith.constant dense<0.000000e+00> : vector<16xf32>
    %21 = vector.multi_reduction <add>, %20, %cst_16 [1] : vector<16x128xf32> to vector<16xf32>
    %22 = vector.shape_cast %21 : vector<16xf32> to vector<16x1xf32>
    %c0_17 = arith.constant 0 : index
    %c0_18 = arith.constant 0 : index
    %23 = vector.load %arg7[%c0_17, %c0_18] : memref<1x128xf32, #tpu.memory_space<vmem>>, vector<1x128xf32>
    %24 = vector.broadcast %22 : vector<16x1xf32> to vector<16x128xf32>
    %25 = vector.broadcast %23 : vector<1x128xf32> to vector<16x128xf32>
    %26 = arith.addf %24, %25 : vector<16x128xf32>
    %cst_19 = arith.constant 2.000000e+00 : f32
    %27 = vector.broadcast %cst_19 : f32 to vector<16x128xf32>
    %28 = arith.mulf %27, %18 : vector<16x128xf32>
    %29 = arith.subf %26, %28 : vector<16x128xf32>
    %cst_20 = arith.constant 0.000000e+00 : f32
    %30 = vector.broadcast %cst_20 : f32 to vector<16x128xf32>
    %31 = arith.maximumf %29, %30 : vector<16x128xf32>
    %32 = math.sqrt %31 : vector<16x128xf32>
    %cst_21 = arith.constant 0.000000e+00 : f32
    %33 = vector.broadcast %cst_21 : f32 to vector<16x128xf32>
    %34 = arith.subf %33, %32 : vector<16x128xf32>
    %c0_22 = arith.constant 0 : index
    %c0_23 = arith.constant 0 : index
    %35 = vector.load %arg9[%c0_22, %c0_23] : memref<16x128xf32, #tpu.memory_space<vmem>>, vector<16x128xf32>
    tpu.vector_store %arg9[%c0_22, %c0_23], %34 {strides = array<i32>} : memref<16x128xf32, #tpu.memory_space<vmem>>, vector<16x128xf32>,
    return
  }
  func.func @transform_0(%arg0: i32) -> (i32, i32) {
    %c0_i32 = arith.constant 0 : i32
    %c0_i32_0 = arith.constant 0 : i32
    return %arg0, %c0_i32 : i32, i32
  }
  func.func @transform_1(%arg0: i32) -> (i32, i32) {
    %c0_i32 = arith.constant 0 : i32
    %c0_i32_0 = arith.constant 0 : i32
    %c0_i32_1 = arith.constant 0 : i32
    return %c0_i32, %c0_i32_0 : i32, i32
  }
  func.func @transform_2(%arg0: i32) -> (i32, i32) {
    %c0_i32 = arith.constant 0 : i32
    %c0_i32_0 = arith.constant 0 : i32
    %c0_i32_1 = arith.constant 0 : i32
    return %c0_i32, %c0_i32_0 : i32, i32
  }
  func.func @transform_3(%arg0: i32) -> (i32, i32) {
    %c0_i32 = arith.constant 0 : i32
    %c0_i32_0 = arith.constant 0 : i32
    %c0_i32_1 = arith.constant 0 : i32
    return %c0_i32, %c0_i32_0 : i32, i32
  }
  func.func @transform_4(%arg0: i32) -> (i32, i32) {
    %c0_i32 = arith.constant 0 : i32
    %c0_i32_0 = arith.constant 0 : i32
    %c0_i32_1 = arith.constant 0 : i32
    return %c0_i32, %c0_i32_0 : i32, i32
  }
  func.func @transform_5(%arg0: i32) -> (i32, i32) {
    %c0_i32 = arith.constant 0 : i32
    %c0_i32_0 = arith.constant 0 : i32
    %c0_i32_1 = arith.constant 0 : i32
    return %c0_i32, %c0_i32_0 : i32, i32
  }
  func.func @transform_6(%arg0: i32) -> (i32, i32) {
    %c0_i32 = arith.constant 0 : i32
    %c0_i32_0 = arith.constant 0 : i32
    %c0_i32_1 = arith.constant 0 : i32
    return %c0_i32, %c0_i32_0 : i32, i32
  }
  func.func @transform_7(%arg0: i32) -> (i32, i32) {
    %c0_i32 = arith.constant 0 : i32
    %c0_i32_0 = arith.constant 0 : i32
    return %arg0, %c0_i32 : i32, i32
  }
  func.func @transform_8(%arg0: i32) -> (i32, i32) {
    %c0_i32 = arith.constant 0 : i32
    %c0_i32_0 = arith.constant 0 : i32
    return %arg0, %c0_i32 : i32, i32
  }
}

module attributes {stable_mosaic.version = 11 : i64} {
  func.func @_protonet_kernel(%arg0: i32, %arg1: memref<16x1024xf32, #tpu.memory_space<vmem>>, %arg2: memref<1024x128xbf16, #tpu.memory_space<vmem>>, %arg3: memref<1x128xf32, #tpu.memory_space<vmem>>, %arg4: memref<128x128xbf16, #tpu.memory_space<vmem>>, %arg5: memref<1x128xf32, #tpu.memory_space<vmem>>, %arg6: memref<128x128xbf16, #tpu.memory_space<vmem>>, %arg7: memref<1x128xf32, #tpu.memory_space<vmem>>, %arg8: memref<16x128xf32, #tpu.memory_space<vmem>>, %arg9: memref<16x128xf32, #tpu.memory_space<vmem>>) attributes {dimension_semantics = [#tpu.dimension_semantics<parallel>], iteration_bounds = array<i64: 1>, scalar_prefetch = 0 : i64, scratch_operands = 0 : i64, tpu.core_type = #tpu.core_type<tc>, window_params = [{transform_indices = @transform_0, window_bounds = array<i64: 16, 1024>}, {pipeline_mode = #tpu.pipeline_mode<synchronous>, transform_indices = @transform_1, window_bounds = array<i64: 1024, 128>}, {pipeline_mode = #tpu.pipeline_mode<synchronous>, transform_indices = @transform_2, window_bounds = array<i64: 1, 128>}, {pipeline_mode = #tpu.pipeline_mode<synchronous>, transform_indices = @transform_3, window_bounds = array<i64: 128, 128>}, {pipeline_mode = #tpu.pipeline_mode<synchronous>, transform_indices = @transform_4, window_bounds = array<i64: 1, 128>}, {pipeline_mode = #tpu.pipeline_mode<synchronous>, transform_indices = @transform_5, window_bounds = array<i64: 128, 128>}, {pipeline_mode = #tpu.pipeline_mode<synchronous>, transform_indices = @transform_6, window_bounds = array<i64: 1, 128>}, {transform_indices = @transform_7, window_bounds = array<i64: 16, 128>}, {transform_indices = @transform_8, window_bounds = array<i64: 16, 128>}]} {
    %c0 = arith.constant 0 : index
    %c0_0 = arith.constant 0 : index
    %0 = vector.load %arg1[%c0, %c0_0] : memref<16x1024xf32, #tpu.memory_space<vmem>>, vector<16x1024xf32>
    %1 = arith.truncf %0 : vector<16x1024xf32> to vector<16x1024xbf16>
    %c0_1 = arith.constant 0 : index
    %c0_2 = arith.constant 0 : index
    %2 = vector.load %arg2[%c0_1, %c0_2] : memref<1024x128xbf16, #tpu.memory_space<vmem>>, vector<1024x128xbf16>
    %cst = arith.constant dense<0.000000e+00> : vector<16x128xf32>
    %3 = tpu.matmul %1, %2, %cst {dimension_numbers = #tpu.dot_dimension_numbers<[1], [0], [0], [1], [0, 0, 1, 1], [], []>} : vector<16x1024xbf16>, vector<1024x128xbf16>, vector<16x128xf32> -> vector<16x128xf32>
    %c0_3 = arith.constant 0 : index
    %c0_4 = arith.constant 0 : index
    %4 = vector.load %arg3[%c0_3, %c0_4] : memref<1x128xf32, #tpu.memory_space<vmem>>, vector<1x128xf32>
    %5 = vector.broadcast %4 : vector<1x128xf32> to vector<16x128xf32>
    %6 = arith.addf %3, %5 : vector<16x128xf32>
    %cst_5 = arith.constant 0.000000e+00 : f32
    %7 = vector.broadcast %cst_5 : f32 to vector<16x128xf32>
    %8 = arith.maximumf %6, %7 : vector<16x128xf32>
    %9 = arith.truncf %8 : vector<16x128xf32> to vector<16x128xbf16>
    %c0_6 = arith.constant 0 : index
    %c0_7 = arith.constant 0 : index
    %10 = vector.load %arg4[%c0_6, %c0_7] : memref<128x128xbf16, #tpu.memory_space<vmem>>, vector<128x128xbf16>
    %cst_8 = arith.constant dense<0.000000e+00> : vector<16x128xf32>
    %11 = tpu.matmul %9, %10, %cst_8 {dimension_numbers = #tpu.dot_dimension_numbers<[1], [0], [0], [1], [0, 0, 1, 1], [], []>} : vector<16x128xbf16>, vector<128x128xbf16>, vector<16x128xf32> -> vector<16x128xf32>
    %c0_9 = arith.constant 0 : index
    %c0_10 = arith.constant 0 : index
    %12 = vector.load %arg5[%c0_9, %c0_10] : memref<1x128xf32, #tpu.memory_space<vmem>>, vector<1x128xf32>
    %13 = vector.broadcast %12 : vector<1x128xf32> to vector<16x128xf32>
    %14 = arith.addf %11, %13 : vector<16x128xf32>
    %c0_11 = arith.constant 0 : index
    %c0_12 = arith.constant 0 : index
    %15 = vector.load %arg8[%c0_11, %c0_12] : memref<16x128xf32, #tpu.memory_space<vmem>>, vector<16x128xf32>
    tpu.vector_store %arg8[%c0_11, %c0_12], %14 {strides = array<i32>} : memref<16x128xf32, #tpu.memory_space<vmem>>, vector<16x128xf32>,
    %16 = arith.truncf %14 : vector<16x128xf32> to vector<16x128xbf16>
    %c0_13 = arith.constant 0 : index
    %c0_14 = arith.constant 0 : index
    %17 = vector.load %arg6[%c0_13, %c0_14] : memref<128x128xbf16, #tpu.memory_space<vmem>>, vector<128x128xbf16>
    %cst_15 = arith.constant dense<0.000000e+00> : vector<16x128xf32>
    %18 = tpu.matmul %16, %17, %cst_15 {dimension_numbers = #tpu.dot_dimension_numbers<[1], [0], [0], [1], [0, 0, 1, 1], [], []>} : vector<16x128xbf16>, vector<128x128xbf16>, vector<16x128xf32> -> vector<16x128xf32>
    %19 = arith.extf %16 : vector<16x128xbf16> to vector<16x128xf32>
    %20 = arith.mulf %19, %19 : vector<16x128xf32>
    %cst_16 = arith.constant dense<0.000000e+00> : vector<16xf32>
    %21 = vector.multi_reduction <add>, %20, %cst_16 [1] : vector<16x128xf32> to vector<16xf32>
    %22 = vector.shape_cast %21 : vector<16xf32> to vector<16x1xf32>
    %c0_17 = arith.constant 0 : index
    %c0_18 = arith.constant 0 : index
    %23 = vector.load %arg7[%c0_17, %c0_18] : memref<1x128xf32, #tpu.memory_space<vmem>>, vector<1x128xf32>
    %24 = vector.broadcast %22 : vector<16x1xf32> to vector<16x128xf32>
    %25 = vector.broadcast %23 : vector<1x128xf32> to vector<16x128xf32>
    %26 = arith.addf %24, %25 : vector<16x128xf32>
    %cst_19 = arith.constant 2.000000e+00 : f32
    %27 = vector.broadcast %cst_19 : f32 to vector<16x128xf32>
    %28 = arith.mulf %27, %18 : vector<16x128xf32>
    %29 = arith.subf %26, %28 : vector<16x128xf32>
    %cst_20 = arith.constant 0.000000e+00 : f32
    %30 = vector.broadcast %cst_20 : f32 to vector<16x128xf32>
    %31 = arith.maximumf %29, %30 : vector<16x128xf32>
    %32 = math.sqrt %31 : vector<16x128xf32>
    %cst_21 = arith.constant 0.000000e+00 : f32
    %33 = vector.broadcast %cst_21 : f32 to vector<16x128xf32>
    %34 = arith.subf %33, %32 : vector<16x128xf32>
    %c0_22 = arith.constant 0 : index
    %c0_23 = arith.constant 0 : index
    %35 = vector.load %arg9[%c0_22, %c0_23] : memref<16x128xf32, #tpu.memory_space<vmem>>, vector<16x128xf32>
    tpu.vector_store %arg9[%c0_22, %c0_23], %34 {strides = array<i32>} : memref<16x128xf32, #tpu.memory_space<vmem>>, vector<16x128xf32>,
    return
  }
  func.func @transform_0(%arg0: i32) -> (i32, i32) {
    %c0_i32 = arith.constant 0 : i32
    %c0_i32_0 = arith.constant 0 : i32
    return %arg0, %c0_i32 : i32, i32
  }
  func.func @transform_1(%arg0: i32) -> (i32, i32) {
    %c0_i32 = arith.constant 0 : i32
    %c0_i32_0 = arith.constant 0 : i32
    %c0_i32_1 = arith.constant 0 : i32
    return %c0_i32, %c0_i32_0 : i32, i32
  }
  func.func @transform_2(%arg0: i32) -> (i32, i32) {
    %c0_i32 = arith.constant 0 : i32
    %c0_i32_0 = arith.constant 0 : i32
    %c0_i32_1 = arith.constant 0 : i32
    return %c0_i32, %c0_i32_0 : i32, i32
  }
  func.func @transform_3(%arg0: i32) -> (i32, i32) {
    %c0_i32 = arith.constant 0 : i32
    %c0_i32_0 = arith.constant 0 : i32
    %c0_i32_1 = arith.constant 0 : i32
    return %c0_i32, %c0_i32_0 : i32, i32
  }
  func.func @transform_4(%arg0: i32) -> (i32, i32) {
    %c0_i32 = arith.constant 0 : i32
    %c0_i32_0 = arith.constant 0 : i32
    %c0_i32_1 = arith.constant 0 : i32
    return %c0_i32, %c0_i32_0 : i32, i32
  }
  func.func @transform_5(%arg0: i32) -> (i32, i32) {
    %c0_i32 = arith.constant 0 : i32
    %c0_i32_0 = arith.constant 0 : i32
    %c0_i32_1 = arith.constant 0 : i32
    return %c0_i32, %c0_i32_0 : i32, i32
  }
  func.func @transform_6(%arg0: i32) -> (i32, i32) {
    %c0_i32 = arith.constant 0 : i32
    %c0_i32_0 = arith.constant 0 : i32
    %c0_i32_1 = arith.constant 0 : i32
    return %c0_i32, %c0_i32_0 : i32, i32
  }
  func.func @transform_7(%arg0: i32) -> (i32, i32) {
    %c0_i32 = arith.constant 0 : i32
    %c0_i32_0 = arith.constant 0 : i32
    return %arg0, %c0_i32 : i32, i32
  }
  func.func @transform_8(%arg0: i32) -> (i32, i32) {
    %c0_i32 = arith.constant 0 : i32
    %c0_i32_0 = arith.constant 0 : i32
    return %arg0, %c0_i32 : i32, i32
  }
}

</mosaic_0001>

<llo_original>
// kernel: protonet_forward.1
$region0: #{protonet_forward.1}
  #allocation0 [shape = 'u32[]', space=smem, size = 0x4, offset = 0x4, fixed_abs, tag = 'smem constant byte address 0x4 - core index']
  #allocation1 [shape = 'u32[144,128]{1,0:T(1,128)}', space=vmem, size = 0x12000, scoped, tag = 'internal scratch']
  %s0 = inlined_call_operand.vmem [shape: f32[16,1024], index: 0, kind: input, shape index: {}]
  %s1 = inlined_call_operand.hbm [shape: bf16[1024,128], index: 1, kind: input, shape index: {}]
  %s2 = inlined_call_operand.vmem [shape: f32[1,128], index: 2, kind: input, shape index: {}]
  %s3 = inlined_call_operand.vmem [shape: bf16[128,128], index: 3, kind: input, shape index: {}]
  %s4 = inlined_call_operand.vmem [shape: f32[1,128], index: 4, kind: input, shape index: {}]
  %s5 = inlined_call_operand.vmem [shape: bf16[128,128], index: 5, kind: input, shape index: {}]
  %s6 = inlined_call_operand.vmem [shape: f32[1,128], index: 6, kind: input, shape index: {}]
  %s7 = inlined_call_operand.vmem [shape: f32[16,128], index: 7, kind: output, shape index: {0}]
  %s8 = inlined_call_operand.vmem [shape: f32[16,128], index: 8, kind: output, shape index: {1}]
  %9 = xla_tuple %s7, %s8
  %s10 = sld [smem:[#allocation0]]
  $region50: #{protonet_forward.1} parent=0
    _
  %s12 = ssub.s32 1, %s10
  %s13 = scalar_select 0, %s12, %s10
  $region1: #{protonet_forward.1} parent=0
    #allocation2 [shape = 'u8[262144]{0}', space=vmem, size = 0x40000, scoped, tag = 'input window, operand 1, single buffered']
    #allocation3 [shape = 's32[1]{0}', space=sflag, size = 0x4, scoped, tag = 'scoped memory for protonet_forward.1']
    %14 = vsyncpa [#allocation3], 0
    // Predicated region
    $region2: #{protonet_forward.1} parent=1 // pred_check
      _
    $region3: #{protonet_forward.1} parent=1 // pred_check_branch
      %16 = sbr.rel (0) target = $region5
    $region4: #{protonet_forward.1} parent=1 // pred_region
      _
    $region5: #{protonet_forward.1} parent=1 // pred_fallthru
      _
    // Predicated region
    $region6: #{protonet_forward.1} parent=1 // pred_check
      _
    $region7: #{protonet_forward.1} parent=1 // pred_check_branch
      %18 = sbr.rel (0) target = $region9
    $region8: #{protonet_forward.1} parent=1 // pred_region
      %s20 = ssub.s32 8192, 8192
      %21 = vsyncadd [#allocation3], %s20
      %s22 = sshll.u32 [#allocation2], 4
      %s23 = int_to_ptr.vmem [resolvable:$true] %s22
      %28 = dma.hbm_to_vmem [thread:$0]  %s1, 8192, %s23, [#allocation3], 64, 64, 4
    $region9: #{protonet_forward.1} parent=1 // pred_fallthru
      _
    // Predicated region
    $region10: #{protonet_forward.1} parent=1 // pred_check
      _
    $region11: #{protonet_forward.1} parent=1 // pred_check_branch
      %30 = sbr.rel (0) target = $region13
    $region12: #{protonet_forward.1} parent=1 // pred_region
      _
    $region13: #{protonet_forward.1} parent=1 // pred_fallthru
      _
    // Predicated region
    $region14: #{protonet_forward.1} parent=1 // pred_check
      _
    $region15: #{protonet_forward.1} parent=1 // pred_check_branch
      %32 = sbr.rel (0) target = $region17
    $region16: #{protonet_forward.1} parent=1 // pred_region
      _
    $region17: #{protonet_forward.1} parent=1 // pred_fallthru
      _
    // Predicated region
    $region18: #{protonet_forward.1} parent=1 // pred_check
      _
    $region19: #{protonet_forward.1} parent=1 // pred_check_branch
      %34 = sbr.rel (0) target = $region21
    $region20: #{protonet_forward.1} parent=1 // pred_region
      _
    $region21: #{protonet_forward.1} parent=1 // pred_fallthru
      _
    // Predicated region
    $region22: #{protonet_forward.1} parent=1 // pred_check
      _
    $region23: #{protonet_forward.1} parent=1 // pred_check_branch
      %36 = sbr.rel (0) target = $region25
    $region24: #{protonet_forward.1} parent=1 // pred_region
      _
    $region25: #{protonet_forward.1} parent=1 // pred_fallthru
      _
    // Predicated region
    $region26: #{protonet_forward.1} parent=1 // pred_check
      _
    $region27: #{protonet_forward.1} parent=1 // pred_check_branch
      %38 = sbr.rel (0) target = $region29
    $region28: #{protonet_forward.1} parent=1 // pred_region
      _
    $region29: #{protonet_forward.1} parent=1 // pred_fallthru
      _
    // Predicated region
    $region30: #{protonet_forward.1} parent=1 // pred_check
      _
    $region31: #{protonet_forward.1} parent=1 // pred_check_branch
      %40 = sbr.rel (0) target = $region33
    $region32: #{protonet_forward.1} parent=1 // pred_region
      %41 = dma.done [#allocation3], 8192
    $region33: #{protonet_forward.1} parent=1 // pred_fallthru
      _
    %v43 = vld [vmem:[%s0] sm:$0xff]
    %v44 = vld [vmem:[%s0 + $0x8] sm:$0xff]
    %v45 = vld [vmem:[%s0 + $0x10] sm:$0xff]
    %v46 = vld [vmem:[%s0 + $0x18] sm:$0xff]
    %v47 = vld [vmem:[%s0 + $0x20] sm:$0xff]
    %v48 = vld [vmem:[%s0 + $0x28] sm:$0xff]
    %v49 = vld [vmem:[%s0 + $0x30] sm:$0xff]
    %v50 = vld [vmem:[%s0 + $0x38] sm:$0xff]
    %v51 = vld [vmem:[%s0 + $0x40] sm:$0xff]
    %v52 = vld [vmem:[%s0 + $0x48] sm:$0xff]
    %v53 = vld [vmem:[%s0 + $0x50] sm:$0xff]
    %v54 = vld [vmem:[%s0 + $0x58] sm:$0xff]
    %v55 = vld [vmem:[%s0 + $0x60] sm:$0xff]
    %v56 = vld [vmem:[%s0 + $0x68] sm:$0xff]
    %v57 = vld [vmem:[%s0 + $0x70] sm:$0xff]
    %v58 = vld [vmem:[%s0 + $0x78] sm:$0xff]
    %v59 = vpack.c.bf16 %v51, %v43
    %v60 = vpack.c.bf16 %v52, %v44
    %v61 = vpack.c.bf16 %v53, %v45
    %v62 = vpack.c.bf16 %v54, %v46
    %v63 = vpack.c.bf16 %v55, %v47
    %v64 = vpack.c.bf16 %v56, %v48
    %v65 = vpack.c.bf16 %v57, %v49
    %v66 = vpack.c.bf16 %v58, %v50
    %v67 = vld [vmem:[#allocation2] sm:$0xf]
    %v68 = vld [vmem:[#allocation2 + $0x4] sm:$0xf]
    %v69 = vld [vmem:[#allocation2 + $0x8] sm:$0xf]
    %v70 = vld [vmem:[#allocation2 + $0xc] sm:$0xf]
    %v71 = vld [vmem:[#allocation2 + $0x10] sm:$0xf]
    %v72 = vld [vmem:[#allocation2 + $0x14] sm:$0xf]
    %v73 = vld [vmem:[#allocation2 + $0x18] sm:$0xf]
    %v74 = vld [vmem:[#allocation2 + $0x1c] sm:$0xf]
    %v75 = vld [vmem:[#allocation2 + $0x20] sm:$0xf]
    %v76 = vld [vmem:[#allocation2 + $0x24] sm:$0xf]
    %v77 = vld [vmem:[#allocation2 + $0x28] sm:$0xf]
    %v78 = vld [vmem:[#allocation2 + $0x2c] sm:$0xf]
    %v79 = vld [vmem:[#allocation2 + $0x30] sm:$0xf]
    %v80 = vld [vmem:[#allocation2 + $0x34] sm:$0xf]
    %v81 = vld [vmem:[#allocation2 + $0x38] sm:$0xf]
    %v82 = vld [vmem:[#allocation2 + $0x3c] sm:$0xf]
    %v83 = vld [vmem:[#allocation2 + $0x40] sm:$0xf]
    %v84 = vld [vmem:[#allocation2 + $0x44] sm:$0xf]
    %v85 = vld [vmem:[#allocation2 + $0x48] sm:$0xf]
    %v86 = vld [vmem:[#allocation2 + $0x4c] sm:$0xf]
    %v87 = vld [vmem:[#allocation2 + $0x50] sm:$0xf]
    %v88 = vld [vmem:[#allocation2 + $0x54] sm:$0xf]
    %v89 = vld [vmem:[#allocation2 + $0x58] sm:$0xf]
    %v90 = vld [vmem:[#allocation2 + $0x5c] sm:$0xf]
    %v91 = vld [vmem:[#allocation2 + $0x60] sm:$0xf]
    %v92 = vld [vmem:[#allocation2 + $0x64] sm:$0xf]
    %v93 = vld [vmem:[#allocation2 + $0x68] sm:$0xf]
    %v94 = vld [vmem:[#allocation2 + $0x6c] sm:$0xf]
    %v95 = vld [vmem:[#allocation2 + $0x70] sm:$0xf]
    %v96 = vld [vmem:[#allocation2 + $0x74] sm:$0xf]
    %v97 = vld [vmem:[#allocation2 + $0x78] sm:$0xf]
    %v98 = vld [vmem:[#allocation2 + $0x7c] sm:$0xf]
    %v99 = vld [vmem:[#allocation2 + $0x80] sm:$0xf]
    %v100 = vld [vmem:[#allocation2 + $0x84] sm:$0xf]
    %v101 = vld [vmem:[#allocation2 + $0x88] sm:$0xf]
    %v102 = vld [vmem:[#allocation2 + $0x8c] sm:$0xf]
    %v103 = vld [vmem:[#allocation2 + $0x90] sm:$0xf]
    %v104 = vld [vmem:[#allocation2 + $0x94] sm:$0xf]
    %v105 = vld [vmem:[#allocation2 + $0x98] sm:$0xf]
    %v106 = vld [vmem:[#allocation2 + $0x9c] sm:$0xf]
    %v107 = vld [vmem:[#allocation2 + $0xa0] sm:$0xf]
    %v108 = vld [vmem:[#allocation2 + $0xa4] sm:$0xf]
    %v109 = vld [vmem:[#allocation2 + $0xa8] sm:$0xf]
    %v110 = vld [vmem:[#allocation2 + $0xac] sm:$0xf]
    %v111 = vld [vmem:[#allocation2 + $0xb0] sm:$0xf]
    %v112 = vld [vmem:[#allocation2 + $0xb4] sm:$0xf]
    %v113 = vld [vmem:[#allocation2 + $0xb8] sm:$0xf]
    %v114 = vld [vmem:[#allocation2 + $0xbc] sm:$0xf]
    %v115 = vld [vmem:[#allocation2 + $0xc0] sm:$0xf]
    %v116 = vld [vmem:[#allocation2 + $0xc4] sm:$0xf]
    %v117 = vld [vmem:[#allocation2 + $0xc8] sm:$0xf]
    %v118 = vld [vmem:[#allocation2 + $0xcc] sm:$0xf]
    %v119 = vld [vmem:[#allocation2 + $0xd0] sm:$0xf]
    %v120 = vld [vmem:[#allocation2 + $0xd4] sm:$0xf]
    %v121 = vld [vmem:[#allocation2 + $0xd8] sm:$0xf]
    %v122 = vld [vmem:[#allocation2 + $0xdc] sm:$0xf]
    %v123 = vld [vmem:[#allocation2 + $0xe0] sm:$0xf]
    %v124 = vld [vmem:[#allocation2 + $0xe4] sm:$0xf]
    %v125 = vld [vmem:[#allocation2 + $0xe8] sm:$0xf]
    %v126 = vld [vmem:[#allocation2 + $0xec] sm:$0xf]
    %v127 = vld [vmem:[#allocation2 + $0xf0] sm:$0xf]
    %v128 = vld [vmem:[#allocation2 + $0xf4] sm:$0xf]
    %v129 = vld [vmem:[#allocation2 + $0xf8] sm:$0xf]
    %v130 = vld [vmem:[#allocation2 + $0xfc] sm:$0xf]
    %v131 = vld [vmem:[#allocation2 + $0x100] sm:$0xf]
    %v132 = vld [vmem:[#allocation2 + $0x104] sm:$0xf]
    %v133 = vld [vmem:[#allocation2 + $0x108] sm:$0xf]
    %v134 = vld [vmem:[#allocation2 + $0x10c] sm:$0xf]
    %v135 = vld [vmem:[#allocation2 + $0x110] sm:$0xf]
    %v136 = vld [vmem:[#allocation2 + $0x114] sm:$0xf]
    %v137 = vld [vmem:[#allocation2 + $0x118] sm:$0xf]
    %v138 = vld [vmem:[#allocation2 + $0x11c] sm:$0xf]
    %v139 = vld [vmem:[#allocation2 + $0x120] sm:$0xf]
    %v140 = vld [vmem:[#allocation2 + $0x124] sm:$0xf]
    %v141 = vld [vmem:[#allocation2 + $0x128] sm:$0xf]
    %v142 = vld [vmem:[#allocation2 + $0x12c] sm:$0xf]
    %v143 = vld [vmem:[#allocation2 + $0x130] sm:$0xf]
    %v144 = vld [vmem:[#allocation2 + $0x134] sm:$0xf]
    %v145 = vld [vmem:[#allocation2 + $0x138] sm:$0xf]
    %v146 = vld [vmem:[#allocation2 + $0x13c] sm:$0xf]
    %v147 = vld [vmem:[#allocation2 + $0x140] sm:$0xf]
    %v148 = vld [vmem:[#allocation2 + $0x144] sm:$0xf]
    %v149 = vld [vmem:[#allocation2 + $0x148] sm:$0xf]
    %v150 = vld [vmem:[#allocation2 + $0x14c] sm:$0xf]
    %v151 = vld [vmem:[#allocation2 + $0x150] sm:$0xf]
    %v152 = vld [vmem:[#allocation2 + $0x154] sm:$0xf]
    %v153 = vld [vmem:[#allocation2 + $0x158] sm:$0xf]
    %v154 = vld [vmem:[#allocation2 + $0x15c] sm:$0xf]
    %v155 = vld [vmem:[#allocation2 + $0x160] sm:$0xf]
    %v156 = vld [vmem:[#allocation2 + $0x164] sm:$0xf]
    %v157 = vld [vmem:[#allocation2 + $0x168] sm:$0xf]
    %v158 = vld [vmem:[#allocation2 + $0x16c] sm:$0xf]
    %v159 = vld [vmem:[#allocation2 + $0x170] sm:$0xf]
    %v160 = vld [vmem:[#allocation2 + $0x174] sm:$0xf]
    %v161 = vld [vmem:[#allocation2 + $0x178] sm:$0xf]
    %v162 = vld [vmem:[#allocation2 + $0x17c] sm:$0xf]
    %v163 = vld [vmem:[#allocation2 + $0x180] sm:$0xf]
    %v164 = vld [vmem:[#allocation2 + $0x184] sm:$0xf]
    %v165 = vld [vmem:[#allocation2 + $0x188] sm:$0xf]
    %v166 = vld [vmem:[#allocation2 + $0x18c] sm:$0xf]
    %v167 = vld [vmem:[#allocation2 + $0x190] sm:$0xf]
    %v168 = vld [vmem:[#allocation2 + $0x194] sm:$0xf]
    %v169 = vld [vmem:[#allocation2 + $0x198] sm:$0xf]
    %v170 = vld [vmem:[#allocation2 + $0x19c] sm:$0xf]
    %v171 = vld [vmem:[#allocation2 + $0x1a0] sm:$0xf]
    %v172 = vld [vmem:[#allocation2 + $0x1a4] sm:$0xf]
    %v173 = vld [vmem:[#allocation2 + $0x1a8] sm:$0xf]
    %v174 = vld [vmem:[#allocation2 + $0x1ac] sm:$0xf]
    %v175 = vld [vmem:[#allocation2 + $0x1b0] sm:$0xf]
    %v176 = vld [vmem:[#allocation2 + $0x1b4] sm:$0xf]
    %v177 = vld [vmem:[#allocation2 + $0x1b8] sm:$0xf]
    %v178 = vld [vmem:[#allocation2 + $0x1bc] sm:$0xf]
    %v179 = vld [vmem:[#allocation2 + $0x1c0] sm:$0xf]
    %v180 = vld [vmem:[#allocation2 + $0x1c4] sm:$0xf]
    %v181 = vld [vmem:[#allocation2 + $0x1c8] sm:$0xf]
    %v182 = vld [vmem:[#allocation2 + $0x1cc] sm:$0xf]
    %v183 = vld [vmem:[#allocation2 + $0x1d0] sm:$0xf]
    %v184 = vld [vmem:[#allocation2 + $0x1d4] sm:$0xf]
    %v185 = vld [vmem:[#allocation2 + $0x1d8] sm:$0xf]
    %v186 = vld [vmem:[#allocation2 + $0x1dc] sm:$0xf]
    %v187 = vld [vmem:[#allocation2 + $0x1e0] sm:$0xf]
    %v188 = vld [vmem:[#allocation2 + $0x1e4] sm:$0xf]
    %v189 = vld [vmem:[#allocation2 + $0x1e8] sm:$0xf]
    %v190 = vld [vmem:[#allocation2 + $0x1ec] sm:$0xf]
    %v191 = vld [vmem:[#allocation2 + $0x1f0] sm:$0xf]
    %v192 = vld [vmem:[#allocation2 + $0x1f4] sm:$0xf]
    %v193 = vld [vmem:[#allocation2 + $0x1f8] sm:$0xf]
    %v194 = vld [vmem:[#allocation2 + $0x1fc] sm:$0xf]
    %v195 = vld [vmem:[%s2] sm:$0x1]
    %v197 = vlaneseq
    %v198 = vshrl.u32 %v197, 7
    %v199 = vsub.s32 0, %v198
    %v200 = vrot.slane %v195, %v199
    %v330 = vunpack.c.l.b16 %v67
    %v331 = vunpack.c.l.b16 %v68
    %v332 = vunpack.c.l.b16 %v69
    %v333 = vunpack.c.l.b16 %v70
    %v334 = vunpack.c.l.b16 %v71
    %v335 = vunpack.c.l.b16 %v72
    %v336 = vunpack.c.l.b16 %v73
    %v337 = vunpack.c.l.b16 %v74
    %v338 = vunpack.c.l.b16 %v75
    %v339 = vunpack.c.l.b16 %v76
    %v340 = vunpack.c.l.b16 %v77
    %v341 = vunpack.c.l.b16 %v78
    %v342 = vunpack.c.l.b16 %v79
    %v343 = vunpack.c.l.b16 %v80
    %v344 = vunpack.c.l.b16 %v81
    %v345 = vunpack.c.l.b16 %v82
    %v346 = vunpack.c.l.b16 %v83
    %v347 = vunpack.c.l.b16 %v84
    %v348 = vunpack.c.l.b16 %v85
    %v349 = vunpack.c.l.b16 %v86
    %v350 = vunpack.c.l.b16 %v87
    %v351 = vunpack.c.l.b16 %v88
    %v352 = vunpack.c.l.b16 %v89
    %v353 = vunpack.c.l.b16 %v90
    %v354 = vunpack.c.l.b16 %v91
    %v355 = vunpack.c.l.b16 %v92
    %v356 = vunpack.c.l.b16 %v93
    %v357 = vunpack.c.l.b16 %v94
    %v358 = vunpack.c.l.b16 %v95
    %v359 = vunpack.c.l.b16 %v96
    %v360 = vunpack.c.l.b16 %v97
    %v361 = vunpack.c.l.b16 %v98
    %v362 = vunpack.c.l.b16 %v99
    %v363 = vunpack.c.l.b16 %v100
    %v364 = vunpack.c.l.b16 %v101
    %v365 = vunpack.c.l.b16 %v102
    %v366 = vunpack.c.l.b16 %v103
    %v367 = vunpack.c.l.b16 %v104
    %v368 = vunpack.c.l.b16 %v105
    %v369 = vunpack.c.l.b16 %v106
    %v370 = vunpack.c.l.b16 %v107
    %v371 = vunpack.c.l.b16 %v108
    %v372 = vunpack.c.l.b16 %v109
    %v373 = vunpack.c.l.b16 %v110
    %v374 = vunpack.c.l.b16 %v111
    %v375 = vunpack.c.l.b16 %v112
    %v376 = vunpack.c.l.b16 %v113
    %v377 = vunpack.c.l.b16 %v114
    %v378 = vunpack.c.l.b16 %v115
    %v379 = vunpack.c.l.b16 %v116
    %v380 = vunpack.c.l.b16 %v117
    %v381 = vunpack.c.l.b16 %v118
    %v382 = vunpack.c.l.b16 %v119
    %v383 = vunpack.c.l.b16 %v120
    %v384 = vunpack.c.l.b16 %v121
    %v385 = vunpack.c.l.b16 %v122
    %v386 = vunpack.c.l.b16 %v123
    %v387 = vunpack.c.l.b16 %v124
    %v388 = vunpack.c.l.b16 %v125
    %v389 = vunpack.c.l.b16 %v126
    %v390 = vunpack.c.l.b16 %v127
    %v391 = vunpack.c.l.b16 %v128
    %v392 = vunpack.c.l.b16 %v129
    %v393 = vunpack.c.l.b16 %v130
    %v394 = vunpack.c.l.b16 %v131
    %v395 = vunpack.c.l.b16 %v132
    %v396 = vunpack.c.l.b16 %v133
    %v397 = vunpack.c.l.b16 %v134
    %v398 = vunpack.c.l.b16 %v135
    %v399 = vunpack.c.l.b16 %v136
    %v400 = vunpack.c.l.b16 %v137
    %v401 = vunpack.c.l.b16 %v138
    %v402 = vunpack.c.l.b16 %v139
    %v403 = vunpack.c.l.b16 %v140
    %v404 = vunpack.c.l.b16 %v141
    %v405 = vunpack.c.l.b16 %v142
    %v406 = vunpack.c.l.b16 %v143
    %v407 = vunpack.c.l.b16 %v144
    %v408 = vunpack.c.l.b16 %v145
    %v409 = vunpack.c.l.b16 %v146
    %v410 = vunpack.c.l.b16 %v147
    %v411 = vunpack.c.l.b16 %v148
    %v412 = vunpack.c.l.b16 %v149
    %v413 = vunpack.c.l.b16 %v150
    %v414 = vunpack.c.l.b16 %v151
    %v415 = vunpack.c.l.b16 %v152
    %v416 = vunpack.c.l.b16 %v153
    %v417 = vunpack.c.l.b16 %v154
    %v418 = vunpack.c.l.b16 %v155
    %v419 = vunpack.c.l.b16 %v156
    %v420 = vunpack.c.l.b16 %v157
    %v421 = vunpack.c.l.b16 %v158
    %v422 = vunpack.c.l.b16 %v159
    %v423 = vunpack.c.l.b16 %v160
    %v424 = vunpack.c.l.b16 %v161
    %v425 = vunpack.c.l.b16 %v162
    %v426 = vunpack.c.l.b16 %v163
    %v427 = vunpack.c.l.b16 %v164
    %v428 = vunpack.c.l.b16 %v165
    %v429 = vunpack.c.l.b16 %v166
    %v430 = vunpack.c.l.b16 %v167
    %v431 = vunpack.c.l.b16 %v168
    %v432 = vunpack.c.l.b16 %v169
    %v433 = vunpack.c.l.b16 %v170
    %v434 = vunpack.c.l.b16 %v171
    %v435 = vunpack.c.l.b16 %v172
    %v436 = vunpack.c.l.b16 %v173
    %v437 = vunpack.c.l.b16 %v174
    %v438 = vunpack.c.l.b16 %v175
    %v439 = vunpack.c.l.b16 %v176
    %v440 = vunpack.c.l.b16 %v177
    %v441 = vunpack.c.l.b16 %v178
    %v442 = vunpack.c.l.b16 %v179
    %v443 = vunpack.c.l.b16 %v180
    %v444 = vunpack.c.l.b16 %v181
    %v445 = vunpack.c.l.b16 %v182
    %v446 = vunpack.c.l.b16 %v183
    %v447 = vunpack.c.l.b16 %v184
    %v448 = vunpack.c.l.b16 %v185
    %v449 = vunpack.c.l.b16 %v186
    %v450 = vunpack.c.l.b16 %v187
    %v451 = vunpack.c.l.b16 %v188
    %v452 = vunpack.c.l.b16 %v189
    %v453 = vunpack.c.l.b16 %v190
    %v454 = vunpack.c.l.b16 %v191
    %v455 = vunpack.c.l.b16 %v192
    %v456 = vunpack.c.l.b16 %v193
    %v457 = vunpack.c.l.b16 %v194
    %v458 = vpack.c.b16 %v331, %v330
    %v459 = vpack.c.b16 %v333, %v332
    %v460 = vpack.c.b16 %v335, %v334
    %v461 = vpack.c.b16 %v337, %v336
    %v462 = vpack.c.b16 %v339, %v338
    %v463 = vpack.c.b16 %v341, %v340
    %v464 = vpack.c.b16 %v343, %v342
    %v465 = vpack.c.b16 %v345, %v344
    %v466 = vpack.c.b16 %v347, %v346
    %v467 = vpack.c.b16 %v349, %v348
    %v468 = vpack.c.b16 %v351, %v350
    %v469 = vpack.c.b16 %v353, %v352
    %v470 = vpack.c.b16 %v355, %v354
    %v471 = vpack.c.b16 %v357, %v356
    %v472 = vpack.c.b16 %v359, %v358
    %v473 = vpack.c.b16 %v361, %v360
    %v474 = vpack.c.b16 %v363, %v362
    %v475 = vpack.c.b16 %v365, %v364
    %v476 = vpack.c.b16 %v367, %v366
    %v477 = vpack.c.b16 %v369, %v368
    %v478 = vpack.c.b16 %v371, %v370
    %v479 = vpack.c.b16 %v373, %v372
    %v480 = vpack.c.b16 %v375, %v374
    %v481 = vpack.c.b16 %v377, %v376
    %v482 = vpack.c.b16 %v379, %v378
    %v483 = vpack.c.b16 %v381, %v380
    %v484 = vpack.c.b16 %v383, %v382
    %v485 = vpack.c.b16 %v385, %v384
    %v486 = vpack.c.b16 %v387, %v386
    %v487 = vpack.c.b16 %v389, %v388
    %v488 = vpack.c.b16 %v391, %v390
    %v489 = vpack.c.b16 %v393, %v392
    %v490 = vpack.c.b16 %v395, %v394
    %v491 = vpack.c.b16 %v397, %v396
    %v492 = vpack.c.b16 %v399, %v398
    %v493 = vpack.c.b16 %v401, %v400
    %v494 = vpack.c.b16 %v403, %v402
    %v495 = vpack.c.b16 %v405, %v404
    %v496 = vpack.c.b16 %v407, %v406
    %v497 = vpack.c.b16 %v409, %v408
    %v498 = vpack.c.b16 %v411, %v410
    %v499 = vpack.c.b16 %v413, %v412
    %v500 = vpack.c.b16 %v415, %v414
    %v501 = vpack.c.b16 %v417, %v416
    %v502 = vpack.c.b16 %v419, %v418
    %v503 = vpack.c.b16 %v421, %v420
    %v504 = vpack.c.b16 %v423, %v422
    %v505 = vpack.c.b16 %v425, %v424
    %v506 = vpack.c.b16 %v427, %v426
    %v507 = vpack.c.b16 %v429, %v428
    %v508 = vpack.c.b16 %v431, %v430
    %v509 = vpack.c.b16 %v433, %v432
    %v510 = vpack.c.b16 %v435, %v434
    %v511 = vpack.c.b16 %v437, %v436
    %v512 = vpack.c.b16 %v439, %v438
    %v513 = vpack.c.b16 %v441, %v440
    %v514 = vpack.c.b16 %v443, %v442
    %v515 = vpack.c.b16 %v445, %v444
    %v516 = vpack.c.b16 %v447, %v446
    %v517 = vpack.c.b16 %v449, %v448
    %v518 = vpack.c.b16 %v451, %v450
    %v519 = vpack.c.b16 %v453, %v452
    %v520 = vpack.c.b16 %v455, %v454
    %v521 = vpack.c.b16 %v457, %v456
    %586 = vmatprep.subr.bf16.mxu0 0
    %587 = vmatpush1.bf16.msra.mxu0 %v465
    %588 = vmatprep.subr.bf16.mxu0 0
    %589 = vmatpush1.bf16.msra.mxu0 %v464
    %590 = vmatprep.subr.bf16.mxu0 0
    %591 = vmatpush1.bf16.msra.mxu0 %v463
    %592 = vmatprep.subr.bf16.mxu0 0
    %593 = vmatpush1.bf16.msra.mxu0 %v462
    %594 = vmatprep.subr.bf16.mxu0 0
    %595 = vmatpush1.bf16.msra.mxu0 %v461
    %596 = vmatprep.subr.bf16.mxu0 0
    %597 = vmatpush1.bf16.msra.mxu0 %v460
    %598 = vmatprep.subr.bf16.mxu0 0
    %599 = vmatpush1.bf16.msra.mxu0 %v459
    %600 = vmatprep.subr.bf16.mxu0 0
    %601 = vmatpush1.bf16.msra.mxu0 %v458
    %602 = vmatprep.subr.bf16.mxu0 0
    %603 = vmatpush2.bf16.msra.mxu0 %v473
    %604 = vmatprep.subr.bf16.mxu0 0
    %605 = vmatpush2.bf16.msra.mxu0 %v472
    %606 = vmatprep.subr.bf16.mxu0 0
    %607 = vmatpush2.bf16.msra.mxu0 %v471
    %608 = vmatprep.subr.bf16.mxu0 0
    %609 = vmatpush2.bf16.msra.mxu0 %v470
    %610 = vmatprep.subr.bf16.mxu0 0
    %611 = vmatpush2.bf16.msra.mxu0 %v469
    %612 = vmatprep.subr.bf16.mxu0 0
    %613 = vmatpush2.bf16.msra.mxu0 %v468
    %614 = vmatprep.subr.bf16.mxu0 0
    %615 = vmatpush2.bf16.msra.mxu0 %v467
    %616 = vmatprep.subr.bf16.mxu0 0
    %617 = vmatpush2.bf16.msra.mxu0 %v466
    %618 = vmatprep.mubr.bf16.mxu0 %v60
    %619 = vmatmul.mubr.bf16.gmra.mxu0 %v59
    %v620 = vpop.f32.mrf.mxu0
    %v621 = vadd.f32 %v200, %v620
    %v622 = vpop.f32.mrf.mxu0
    %v623 = vpop.f32.mrf.mxu0
    %v624 = vadd.f32 %v200, %v623
    %v625 = vpop.f32.mrf.mxu0
    %626 = vdwg.mxu0
    %627 = vmatprep.subr.bf16.mxu0 0
    %628 = vmatpush1.bf16.msra.mxu0 %v481
    %629 = vmatprep.subr.bf16.mxu0 0
    %630 = vmatpush1.bf16.msra.mxu0 %v480
    %631 = vmatprep.subr.bf16.mxu0 0
    %632 = vmatpush1.bf16.msra.mxu0 %v479
    %633 = vmatprep.subr.bf16.mxu0 0
    %634 = vmatpush1.bf16.msra.mxu0 %v478
    %635 = vmatprep.subr.bf16.mxu0 0
    %636 = vmatpush1.bf16.msra.mxu0 %v477
    %637 = vmatprep.subr.bf16.mxu0 0
    %638 = vmatpush1.bf16.msra.mxu0 %v476
    %639 = vmatprep.subr.bf16.mxu0 0
    %640 = vmatpush1.bf16.msra.mxu0 %v475
    %641 = vmatprep.subr.bf16.mxu0 0
    %642 = vmatpush1.bf16.msra.mxu0 %v474
    %643 = vmatprep.subr.bf16.mxu0 0
    %644 = vmatpush2.bf16.msra.mxu0 %v489
    %645 = vmatprep.subr.bf16.mxu0 0
    %646 = vmatpush2.bf16.msra.mxu0 %v488
    %647 = vmatprep.subr.bf16.mxu0 0
    %648 = vmatpush2.bf16.msra.mxu0 %v487
    %649 = vmatprep.subr.bf16.mxu0 0
    %650 = vmatpush2.bf16.msra.mxu0 %v486
    %651 = vmatprep.subr.bf16.mxu0 0
    %652 = vmatpush2.bf16.msra.mxu0 %v485
    %653 = vmatprep.subr.bf16.mxu0 0
    %654 = vmatpush2.bf16.msra.mxu0 %v484
    %655 = vmatprep.subr.bf16.mxu0 0
    %656 = vmatpush2.bf16.msra.mxu0 %v483
    %657 = vmatprep.subr.bf16.mxu0 0
    %658 = vmatpush2.bf16.msra.mxu0 %v482
    %659 = vmatprep.mubr.bf16.mxu0 %v62
    %660 = vmatmul.mubr.bf16.gmra.mxu0 %v61
    %v661 = vpop.f32.mrf.mxu0
    %v662 = vadd.f32 %v621, %v661
    %v663 = vpop.f32.mrf.mxu0
    %v664 = vpop.f32.mrf.mxu0
    %v665 = vadd.f32 %v624, %v664
    %v666 = vpop.f32.mrf.mxu0
    %667 = vdwg.mxu0
    %668 = vmatprep.subr.bf16.mxu0 0
    %669 = vmatpush1.bf16.msra.mxu0 %v497
    %670 = vmatprep.subr.bf16.mxu0 0
    %671 = vmatpush1.bf16.msra.mxu0 %v496
    %672 = vmatprep.subr.bf16.mxu0 0
    %673 = vmatpush1.bf16.msra.mxu0 %v495
    %674 = vmatprep.subr.bf16.mxu0 0
    %675 = vmatpush1.bf16.msra.mxu0 %v494
    %676 = vmatprep.subr.bf16.mxu0 0
    %677 = vmatpush1.bf16.msra.mxu0 %v493
    %678 = vmatprep.subr.bf16.mxu0 0
    %679 = vmatpush1.bf16.msra.mxu0 %v492
    %680 = vmatprep.subr.bf16.mxu0 0
    %681 = vmatpush1.bf16.msra.mxu0 %v491
    %682 = vmatprep.subr.bf16.mxu0 0
    %683 = vmatpush1.bf16.msra.mxu0 %v490
    %684 = vmatprep.subr.bf16.mxu0 0
    %685 = vmatpush2.bf16.msra.mxu0 %v505
    %686 = vmatprep.subr.bf16.mxu0 0
    %687 = vmatpush2.bf16.msra.mxu0 %v504
    %688 = vmatprep.subr.bf16.mxu0 0
    %689 = vmatpush2.bf16.msra.mxu0 %v503
    %690 = vmatprep.subr.bf16.mxu0 0
    %691 = vmatpush2.bf16.msra.mxu0 %v502
    %692 = vmatprep.subr.bf16.mxu0 0
    %693 = vmatpush2.bf16.msra.mxu0 %v501
    %694 = vmatprep.subr.bf16.mxu0 0
    %695 = vmatpush2.bf16.msra.mxu0 %v500
    %696 = vmatprep.subr.bf16.mxu0 0
    %697 = vmatpush2.bf16.msra.mxu0 %v499
    %698 = vmatprep.subr.bf16.mxu0 0
    %699 = vmatpush2.bf16.msra.mxu0 %v498
    %700 = vmatprep.mubr.bf16.mxu0 %v64
    %701 = vmatmul.mubr.bf16.gmra.mxu0 %v63
    %v702 = vpop.f32.mrf.mxu0
    %v703 = vadd.f32 %v662, %v702
    %v704 = vpop.f32.mrf.mxu0
    %v705 = vpop.f32.mrf.mxu0
    %v706 = vadd.f32 %v665, %v705
    %v707 = vpop.f32.mrf.mxu0
    %708 = vdwg.mxu0
    %709 = vmatprep.subr.bf16.mxu0 0
    %710 = vmatpush1.bf16.msra.mxu0 %v513
    %711 = vmatprep.subr.bf16.mxu0 0
    %712 = vmatpush1.bf16.msra.mxu0 %v512
    %713 = vmatprep.subr.bf16.mxu0 0
    %714 = vmatpush1.bf16.msra.mxu0 %v511
    %715 = vmatprep.subr.bf16.mxu0 0
    %716 = vmatpush1.bf16.msra.mxu0 %v510
    %717 = vmatprep.subr.bf16.mxu0 0
    %718 = vmatpush1.bf16.msra.mxu0 %v509
    %719 = vmatprep.subr.bf16.mxu0 0
    %720 = vmatpush1.bf16.msra.mxu0 %v508
    %721 = vmatprep.subr.bf16.mxu0 0
    %722 = vmatpush1.bf16.msra.mxu0 %v507
    %723 = vmatprep.subr.bf16.mxu0 0
    %724 = vmatpush1.bf16.msra.mxu0 %v506
    %725 = vmatprep.subr.bf16.mxu0 0
    %726 = vmatpush2.bf16.msra.mxu0 %v521
    %727 = vmatprep.subr.bf16.mxu0 0
    %728 = vmatpush2.bf16.msra.mxu0 %v520
    %729 = vmatprep.subr.bf16.mxu0 0
    %730 = vmatpush2.bf16.msra.mxu0 %v519
    %731 = vmatprep.subr.bf16.mxu0 0
    %732 = vmatpush2.bf16.msra.mxu0 %v518
    %733 = vmatprep.subr.bf16.mxu0 0
    %734 = vmatpush2.bf16.msra.mxu0 %v517
    %735 = vmatprep.subr.bf16.mxu0 0
    %736 = vmatpush2.bf16.msra.mxu0 %v516
    %737 = vmatprep.subr.bf16.mxu0 0
    %738 = vmatpush2.bf16.msra.mxu0 %v515
    %739 = vmatprep.subr.bf16.mxu0 0
    %740 = vmatpush2.bf16.msra.mxu0 %v514
    %741 = vmatprep.mubr.bf16.mxu0 %v66
    %742 = vmatmul.mubr.bf16.gmra.mxu0 %v65
    %v743 = vpop.f32.mrf.mxu0
    %v744 = vadd.f32 %v703, %v743
    %v745 = vpop.f32.mrf.mxu0
    %v746 = vpop.f32.mrf.mxu0
    %v747 = vadd.f32 %v706, %v746
    %v748 = vpop.f32.mrf.mxu0
    %749 = vdwg.mxu0
    %v750 = vmax.f32 %v744, 0.0
    %v751 = vmax.f32 %v747, 0.0
    %v752 = vpack.c.bf16 %v751, %v750
    %v753 = vld [vmem:[%s3] sm:$0xf]
    %v754 = vld [vmem:[%s3 + $0x4] sm:$0xf]
    %v755 = vld [vmem:[%s3 + $0x8] sm:$0xf]
    %v756 = vld [vmem:[%s3 + $0xc] sm:$0xf]
    %v757 = vld [vmem:[%s3 + $0x10] sm:$0xf]
    %v758 = vld [vmem:[%s3 + $0x14] sm:$0xf]
    %v759 = vld [vmem:[%s3 + $0x18] sm:$0xf]
    %v760 = vld [vmem:[%s3 + $0x1c] sm:$0xf]
    %v761 = vld [vmem:[%s3 + $0x20] sm:$0xf]
    %v762 = vld [vmem:[%s3 + $0x24] sm:$0xf]
    %v763 = vld [vmem:[%s3 + $0x28] sm:$0xf]
    %v764 = vld [vmem:[%s3 + $0x2c] sm:$0xf]
    %v765 = vld [vmem:[%s3 + $0x30] sm:$0xf]
    %v766 = vld [vmem:[%s3 + $0x34] sm:$0xf]
    %v767 = vld [vmem:[%s3 + $0x38] sm:$0xf]
    %v768 = vld [vmem:[%s3 + $0x3c] sm:$0xf]
    %v769 = vld [vmem:[%s4] sm:$0x1]
    %v771 = vlaneseq
    %v772 = vshrl.u32 %v771, 7
    %v773 = vsub.s32 0, %v772
    %v774 = vrot.slane %v769, %v773
    %v792 = vunpack.c.l.b16 %v753
    %v793 = vunpack.c.l.b16 %v754
    %v794 = vunpack.c.l.b16 %v755
    %v795 = vunpack.c.l.b16 %v756
    %v796 = vunpack.c.l.b16 %v757
    %v797 = vunpack.c.l.b16 %v758
    %v798 = vunpack.c.l.b16 %v759
    %v799 = vunpack.c.l.b16 %v760
    %v800 = vunpack.c.l.b16 %v761
    %v801 = vunpack.c.l.b16 %v762
    %v802 = vunpack.c.l.b16 %v763
    %v803 = vunpack.c.l.b16 %v764
    %v804 = vunpack.c.l.b16 %v765
    %v805 = vunpack.c.l.b16 %v766
    %v806 = vunpack.c.l.b16 %v767
    %v807 = vunpack.c.l.b16 %v768
    %v808 = vpack.c.b16 %v793, %v792
    %v809 = vpack.c.b16 %v795, %v794
    %v810 = vpack.c.b16 %v797, %v796
    %v811 = vpack.c.b16 %v799, %v798
    %v812 = vpack.c.b16 %v801, %v800
    %v813 = vpack.c.b16 %v803, %v802
    %v814 = vpack.c.b16 %v805, %v804
    %v815 = vpack.c.b16 %v807, %v806
    %824 = vmatprep.subr.bf16.mxu0 0
    %825 = vmatpush1.bf16.msra.mxu0 %v815
    %826 = vmatprep.subr.bf16.mxu0 0
    %827 = vmatpush1.bf16.msra.mxu0 %v814
    %828 = vmatprep.subr.bf16.mxu0 0
    %829 = vmatpush1.bf16.msra.mxu0 %v813
    %830 = vmatprep.subr.bf16.mxu0 0
    %831 = vmatpush1.bf16.msra.mxu0 %v812
    %832 = vmatprep.subr.bf16.mxu0 0
    %833 = vmatpush1.bf16.msra.mxu0 %v811
    %834 = vmatprep.subr.bf16.mxu0 0
    %835 = vmatpush1.bf16.msra.mxu0 %v810
    %836 = vmatprep.subr.bf16.mxu0 0
    %837 = vmatpush1.bf16.msra.mxu0 %v809
    %838 = vmatprep.subr.bf16.mxu0 0
    %839 = vmatpush1.bf16.msra.mxu0 %v808
    %840 = vmatprep.subr.bf16.mxu0 0
    %841 = vmatpush2.bf16.msra.mxu0 0
    %842 = vmatprep.subr.bf16.mxu0 0
    %843 = vmatpush2.bf16.msra.mxu0 0
    %844 = vmatprep.subr.bf16.mxu0 0
    %845 = vmatpush2.bf16.msra.mxu0 0
    %846 = vmatprep.subr.bf16.mxu0 0
    %847 = vmatpush2.bf16.msra.mxu0 0
    %848 = vmatprep.subr.bf16.mxu0 0
    %849 = vmatpush2.bf16.msra.mxu0 0
    %850 = vmatprep.subr.bf16.mxu0 0
    %851 = vmatpush2.bf16.msra.mxu0 0
    %852 = vmatprep.subr.bf16.mxu0 0
    %853 = vmatpush2.bf16.msra.mxu0 0
    %854 = vmatprep.subr.bf16.mxu0 0
    %855 = vmatpush2.bf16.msra.mxu0 0
    %856 = vmatprep.mubr.bf16.mxu0 0
    %857 = vmatmul.mubr.bf16.gmra.mxu0 %v752
    %v858 = vpop.f32.mrf.mxu0
    %v859 = vadd.f32 %v774, %v858
    %v860 = vpop.f32.mrf.mxu0
    %v861 = vpop.f32.mrf.mxu0
    %v862 = vadd.f32 %v774, %v861
    %v863 = vpop.f32.mrf.mxu0
    %864 = vdwg.mxu0
    %865 = vst [vmem:[%s7] sm:$0xff] %v859
    %866 = vst [vmem:[%s7 + $0x8] sm:$0xff] %v862
    %v867 = vpack.c.bf16 %v862, %v859
    %v868 = vld [vmem:[%s5] sm:$0xf]
    %v869 = vld [vmem:[%s5 + $0x4] sm:$0xf]
    %v870 = vld [vmem:[%s5 + $0x8] sm:$0xf]
    %v871 = vld [vmem:[%s5 + $0xc] sm:$0xf]
    %v872 = vld [vmem:[%s5 + $0x10] sm:$0xf]
    %v873 = vld [vmem:[%s5 + $0x14] sm:$0xf]
    %v874 = vld [vmem:[%s5 + $0x18] sm:$0xf]
    %v875 = vld [vmem:[%s5 + $0x1c] sm:$0xf]
    %v876 = vld [vmem:[%s5 + $0x20] sm:$0xf]
    %v877 = vld [vmem:[%s5 + $0x24] sm:$0xf]
    %v878 = vld [vmem:[%s5 + $0x28] sm:$0xf]
    %v879 = vld [vmem:[%s5 + $0x2c] sm:$0xf]
    %v880 = vld [vmem:[%s5 + $0x30] sm:$0xf]
    %v881 = vld [vmem:[%s5 + $0x34] sm:$0xf]
    %v882 = vld [vmem:[%s5 + $0x38] sm:$0xf]
    %v883 = vld [vmem:[%s5 + $0x3c] sm:$0xf]
    %v900 = vunpack.c.l.b16 %v868
    %v901 = vunpack.c.l.b16 %v869
    %v902 = vunpack.c.l.b16 %v870
    %v903 = vunpack.c.l.b16 %v871
    %v904 = vunpack.c.l.b16 %v872
    %v905 = vunpack.c.l.b16 %v873
    %v906 = vunpack.c.l.b16 %v874
    %v907 = vunpack.c.l.b16 %v875
    %v908 = vunpack.c.l.b16 %v876
    %v909 = vunpack.c.l.b16 %v877
    %v910 = vunpack.c.l.b16 %v878
    %v911 = vunpack.c.l.b16 %v879
    %v912 = vunpack.c.l.b16 %v880
    %v913 = vunpack.c.l.b16 %v881
    %v914 = vunpack.c.l.b16 %v882
    %v915 = vunpack.c.l.b16 %v883
    %v916 = vpack.c.b16 %v901, %v900
    %v917 = vpack.c.b16 %v903, %v902
    %v918 = vpack.c.b16 %v905, %v904
    %v919 = vpack.c.b16 %v907, %v906
    %v920 = vpack.c.b16 %v909, %v908
    %v921 = vpack.c.b16 %v911, %v910
    %v922 = vpack.c.b16 %v913, %v912
    %v923 = vpack.c.b16 %v915, %v914
    %932 = vmatprep.subr.bf16.mxu0 0
    %933 = vmatpush1.bf16.msra.mxu0 %v923
    %934 = vmatprep.subr.bf16.mxu0 0
    %935 = vmatpush1.bf16.msra.mxu0 %v922
    %936 = vmatprep.subr.bf16.mxu0 0
    %937 = vmatpush1.bf16.msra.mxu0 %v921
    %938 = vmatprep.subr.bf16.mxu0 0
    %939 = vmatpush1.bf16.msra.mxu0 %v920
    %940 = vmatprep.subr.bf16.mxu0 0
    %941 = vmatpush1.bf16.msra.mxu0 %v919
    %942 = vmatprep.subr.bf16.mxu0 0
    %943 = vmatpush1.bf16.msra.mxu0 %v918
    %944 = vmatprep.subr.bf16.mxu0 0
    %945 = vmatpush1.bf16.msra.mxu0 %v917
    %946 = vmatprep.subr.bf16.mxu0 0
    %947 = vmatpush1.bf16.msra.mxu0 %v916
    %948 = vmatprep.subr.bf16.mxu0 0
    %949 = vmatpush2.bf16.msra.mxu0 0
    %950 = vmatprep.subr.bf16.mxu0 0
    %951 = vmatpush2.bf16.msra.mxu0 0
    %952 = vmatprep.subr.bf16.mxu0 0
    %953 = vmatpush2.bf16.msra.mxu0 0
    %954 = vmatprep.subr.bf16.mxu0 0
    %955 = vmatpush2.bf16.msra.mxu0 0
    %956 = vmatprep.subr.bf16.mxu0 0
    %957 = vmatpush2.bf16.msra.mxu0 0
    %958 = vmatprep.subr.bf16.mxu0 0
    %959 = vmatpush2.bf16.msra.mxu0 0
    %960 = vmatprep.subr.bf16.mxu0 0
    %961 = vmatpush2.bf16.msra.mxu0 0
    %962 = vmatprep.subr.bf16.mxu0 0
    %963 = vmatpush2.bf16.msra.mxu0 0
    %964 = vmatprep.mubr.bf16.mxu0 0
    %965 = vmatmul.mubr.bf16.gmra.mxu0 %v867
    %v966 = vpop.f32.mrf.mxu0
    %v967 = vadd.f32 0.0, %v966
    %v968 = vpop.f32.mrf.mxu0
    %v969 = vpop.f32.mrf.mxu0
    %v970 = vadd.f32 0.0, %v969
    %v971 = vpop.f32.mrf.mxu0
    %972 = vdwg.mxu0
    %v973 = vunpack.c.l.bf16 %v867
    %v974 = vunpack.c.h.bf16 %v867
    %v975 = vmul.f32 %v973, %v973
    %v976 = vmul.f32 %v974, %v974
    %977 = vadd.xlane.f32.xlu0 %v975
    %v978 = vpop.xlane.xlu0 %977
    %979 = vadd.xlane.f32.xlu0 %v976
    %v980 = vpop.xlane.xlu0 %979
    %v981 = vld [vmem:[%s6] sm:$0x1]
    %v983 = vlaneseq
    %v984 = vshrl.u32 %v983, 7
    %v985 = vsub.s32 0, %v984
    %v986 = vrot.slane %v981, %v985
    %v988 = vadd.f32 %v978, %v986
    %v989 = vadd.f32 %v980, %v986
    %v990 = vmul.f32 %v967, 2.0
    %v991 = vmul.f32 %v970, 2.0
    %v992 = vsub.f32 %v988, %v990
    %v993 = vsub.f32 %v989, %v991
    %v994 = vmax.f32 %v992, 0.0
    %v995 = vmax.f32 %v993, 0.0
    %v996 = vrsqrt.pop %v994
    %v997 = vmul.f32 %v994, %v996
    %vm998 = vcmp.eq.f32.partialorder %v994, inf
    %v999 = vsel %vm998, %v994, %v997
    %vm1000 = vcmp.eq.f32.partialorder %v994, 0.0
    %v1001 = vand.u32 %v994, 2147483648
    %v1002 = vsel %vm1000, %v1001, %v999
    %v1003 = vrsqrt.pop %v995
    %v1004 = vmul.f32 %v995, %v1003
    %vm1005 = vcmp.eq.f32.partialorder %v995, inf
    %v1006 = vsel %vm1005, %v995, %v1004
    %vm1007 = vcmp.eq.f32.partialorder %v995, 0.0
    %v1008 = vand.u32 %v995, 2147483648
    %v1009 = vsel %vm1007, %v1008, %v1006
    %v1010 = vsub.f32 0.0, %v1002
    %v1011 = vsub.f32 0.0, %v1009
    %1012 = vst [vmem:[%s8] sm:$0xff] %v1010
    %1013 = vst [vmem:[%s8 + $0x8] sm:$0xff] %v1011
    // Predicated region
    $region34: #{protonet_forward.1} parent=1 // pred_check
      _
    $region35: #{protonet_forward.1} parent=1 // pred_check_branch
      %1015 = sbr.rel (0) target = $region37
    $region36: #{protonet_forward.1} parent=1 // pred_region
      _
    $region37: #{protonet_forward.1} parent=1 // pred_fallthru
      _
    // Predicated region
    $region38: #{protonet_forward.1} parent=1 // pred_check
      _
    $region39: #{protonet_forward.1} parent=1 // pred_check_branch
      %1017 = sbr.rel (0) target = $region41
    $region40: #{protonet_forward.1} parent=1 // pred_region
      _
    $region41: #{protonet_forward.1} parent=1 // pred_fallthru
      _
    // Predicated region
    $region42: #{protonet_forward.1} parent=1 // pred_check
      _
    $region43: #{protonet_forward.1} parent=1 // pred_check_branch
      %1019 = sbr.rel (0) target = $region45
    $region44: #{protonet_forward.1} parent=1 // pred_region
      _
    $region45: #{protonet_forward.1} parent=1 // pred_fallthru
      _
    // Predicated region
    $region46: #{protonet_forward.1} parent=1 // pred_check
      _
    $region47: #{protonet_forward.1} parent=1 // pred_check_branch
      %1021 = sbr.rel (0) target = $region49
    $region48: #{protonet_forward.1} parent=1 // pred_region
      _
    $region49: #{protonet_forward.1} parent=1 // pred_fallthru
      _
    %1022 = vsyncpa [#allocation3], 1

// kernel: protonet_forward.1
$region0: #{protonet_forward.1}
  #allocation0 [shape = 'u32[]', space=smem, size = 0x4, offset = 0x4, fixed_abs, tag = 'smem constant byte address 0x4 - core index']
  #allocation1 [shape = 'u32[144,128]{1,0:T(1,128)}', space=vmem, size = 0x12000, scoped, tag = 'internal scratch']
  %s0 = inlined_call_operand.vmem [shape: f32[16,1024], index: 0, kind: input, shape index: {}]
  %s1 = inlined_call_operand.hbm [shape: bf16[1024,128], index: 1, kind: input, shape index: {}]
  %s2 = inlined_call_operand.vmem [shape: f32[1,128], index: 2, kind: input, shape index: {}]
  %s3 = inlined_call_operand.vmem [shape: bf16[128,128], index: 3, kind: input, shape index: {}]
  %s4 = inlined_call_operand.vmem [shape: f32[1,128], index: 4, kind: input, shape index: {}]
  %s5 = inlined_call_operand.vmem [shape: bf16[128,128], index: 5, kind: input, shape index: {}]
  %s6 = inlined_call_operand.vmem [shape: f32[1,128], index: 6, kind: input, shape index: {}]
  %s7 = inlined_call_operand.vmem [shape: f32[16,128], index: 7, kind: output, shape index: {0}]
  %s8 = inlined_call_operand.vmem [shape: f32[16,128], index: 8, kind: output, shape index: {1}]
  %9 = xla_tuple %s7, %s8
  %s10 = sld [smem:[#allocation0]]
  $region50: #{protonet_forward.1} parent=0
    _
  %s12 = ssub.s32 1, %s10
  %s13 = scalar_select 0, %s12, %s10
  $region1: #{protonet_forward.1} parent=0
    #allocation2 [shape = 'u8[262144]{0}', space=vmem, size = 0x40000, scoped, tag = 'input window, operand 1, single buffered']
    #allocation3 [shape = 's32[1]{0}', space=sflag, size = 0x4, scoped, tag = 'scoped memory for protonet_forward.1']
    %14 = vsyncpa [#allocation3], 0
    // Predicated region
    $region2: #{protonet_forward.1} parent=1 // pred_check
      _
    $region3: #{protonet_forward.1} parent=1 // pred_check_branch
      %16 = sbr.rel (0) target = $region5
    $region4: #{protonet_forward.1} parent=1 // pred_region
      _
    $region5: #{protonet_forward.1} parent=1 // pred_fallthru
      _
    // Predicated region
    $region6: #{protonet_forward.1} parent=1 // pred_check
      _
    $region7: #{protonet_forward.1} parent=1 // pred_check_branch
      %18 = sbr.rel (0) target = $region9
    $region8: #{protonet_forward.1} parent=1 // pred_region
      %s20 = ssub.s32 8192, 8192
      %21 = vsyncadd [#allocation3], %s20
      %s22 = sshll.u32 [#allocation2], 4
      %s23 = int_to_ptr.vmem [resolvable:$true] %s22
      %28 = dma.hbm_to_vmem [thread:$0]  %s1, 8192, %s23, [#allocation3], 64, 64, 4
    $region9: #{protonet_forward.1} parent=1 // pred_fallthru
      _
    // Predicated region
    $region10: #{protonet_forward.1} parent=1 // pred_check
      _
    $region11: #{protonet_forward.1} parent=1 // pred_check_branch
      %30 = sbr.rel (0) target = $region13
    $region12: #{protonet_forward.1} parent=1 // pred_region
      _
    $region13: #{protonet_forward.1} parent=1 // pred_fallthru
      _
    // Predicated region
    $region14: #{protonet_forward.1} parent=1 // pred_check
      _
    $region15: #{protonet_forward.1} parent=1 // pred_check_branch
      %32 = sbr.rel (0) target = $region17
    $region16: #{protonet_forward.1} parent=1 // pred_region
      _
    $region17: #{protonet_forward.1} parent=1 // pred_fallthru
      _
    // Predicated region
    $region18: #{protonet_forward.1} parent=1 // pred_check
      _
    $region19: #{protonet_forward.1} parent=1 // pred_check_branch
      %34 = sbr.rel (0) target = $region21
    $region20: #{protonet_forward.1} parent=1 // pred_region
      _
    $region21: #{protonet_forward.1} parent=1 // pred_fallthru
      _
    // Predicated region
    $region22: #{protonet_forward.1} parent=1 // pred_check
      _
    $region23: #{protonet_forward.1} parent=1 // pred_check_branch
      %36 = sbr.rel (0) target = $region25
    $region24: #{protonet_forward.1} parent=1 // pred_region
      _
    $region25: #{protonet_forward.1} parent=1 // pred_fallthru
      _
    // Predicated region
    $region26: #{protonet_forward.1} parent=1 // pred_check
      _
    $region27: #{protonet_forward.1} parent=1 // pred_check_branch
      %38 = sbr.rel (0) target = $region29
    $region28: #{protonet_forward.1} parent=1 // pred_region
      _
    $region29: #{protonet_forward.1} parent=1 // pred_fallthru
      _
    // Predicated region
    $region30: #{protonet_forward.1} parent=1 // pred_check
      _
    $region31: #{protonet_forward.1} parent=1 // pred_check_branch
      %40 = sbr.rel (0) target = $region33
    $region32: #{protonet_forward.1} parent=1 // pred_region
      %41 = dma.done [#allocation3], 8192
    $region33: #{protonet_forward.1} parent=1 // pred_fallthru
      _
    %v43 = vld [vmem:[%s0] sm:$0xff]
    %v44 = vld [vmem:[%s0 + $0x8] sm:$0xff]
    %v45 = vld [vmem:[%s0 + $0x10] sm:$0xff]
    %v46 = vld [vmem:[%s0 + $0x18] sm:$0xff]
    %v47 = vld [vmem:[%s0 + $0x20] sm:$0xff]
    %v48 = vld [vmem:[%s0 + $0x28] sm:$0xff]
    %v49 = vld [vmem:[%s0 + $0x30] sm:$0xff]
    %v50 = vld [vmem:[%s0 + $0x38] sm:$0xff]
    %v51 = vld [vmem:[%s0 + $0x40] sm:$0xff]
    %v52 = vld [vmem:[%s0 + $0x48] sm:$0xff]
    %v53 = vld [vmem:[%s0 + $0x50] sm:$0xff]
    %v54 = vld [vmem:[%s0 + $0x58] sm:$0xff]
    %v55 = vld [vmem:[%s0 + $0x60] sm:$0xff]
    %v56 = vld [vmem:[%s0 + $0x68] sm:$0xff]
    %v57 = vld [vmem:[%s0 + $0x70] sm:$0xff]
    %v58 = vld [vmem:[%s0 + $0x78] sm:$0xff]
    %v59 = vpack.c.bf16 %v51, %v43
    %v60 = vpack.c.bf16 %v52, %v44
    %v61 = vpack.c.bf16 %v53, %v45
    %v62 = vpack.c.bf16 %v54, %v46
    %v63 = vpack.c.bf16 %v55, %v47
    %v64 = vpack.c.bf16 %v56, %v48
    %v65 = vpack.c.bf16 %v57, %v49
    %v66 = vpack.c.bf16 %v58, %v50
    %v67 = vld [vmem:[#allocation2] sm:$0xf]
    %v68 = vld [vmem:[#allocation2 + $0x4] sm:$0xf]
    %v69 = vld [vmem:[#allocation2 + $0x8] sm:$0xf]
    %v70 = vld [vmem:[#allocation2 + $0xc] sm:$0xf]
    %v71 = vld [vmem:[#allocation2 + $0x10] sm:$0xf]
    %v72 = vld [vmem:[#allocation2 + $0x14] sm:$0xf]
    %v73 = vld [vmem:[#allocation2 + $0x18] sm:$0xf]
    %v74 = vld [vmem:[#allocation2 + $0x1c] sm:$0xf]
    %v75 = vld [vmem:[#allocation2 + $0x20] sm:$0xf]
    %v76 = vld [vmem:[#allocation2 + $0x24] sm:$0xf]
    %v77 = vld [vmem:[#allocation2 + $0x28] sm:$0xf]
    %v78 = vld [vmem:[#allocation2 + $0x2c] sm:$0xf]
    %v79 = vld [vmem:[#allocation2 + $0x30] sm:$0xf]
    %v80 = vld [vmem:[#allocation2 + $0x34] sm:$0xf]
    %v81 = vld [vmem:[#allocation2 + $0x38] sm:$0xf]
    %v82 = vld [vmem:[#allocation2 + $0x3c] sm:$0xf]
    %v83 = vld [vmem:[#allocation2 + $0x40] sm:$0xf]
    %v84 = vld [vmem:[#allocation2 + $0x44] sm:$0xf]
    %v85 = vld [vmem:[#allocation2 + $0x48] sm:$0xf]
    %v86 = vld [vmem:[#allocation2 + $0x4c] sm:$0xf]
    %v87 = vld [vmem:[#allocation2 + $0x50] sm:$0xf]
    %v88 = vld [vmem:[#allocation2 + $0x54] sm:$0xf]
    %v89 = vld [vmem:[#allocation2 + $0x58] sm:$0xf]
    %v90 = vld [vmem:[#allocation2 + $0x5c] sm:$0xf]
    %v91 = vld [vmem:[#allocation2 + $0x60] sm:$0xf]
    %v92 = vld [vmem:[#allocation2 + $0x64] sm:$0xf]
    %v93 = vld [vmem:[#allocation2 + $0x68] sm:$0xf]
    %v94 = vld [vmem:[#allocation2 + $0x6c] sm:$0xf]
    %v95 = vld [vmem:[#allocation2 + $0x70] sm:$0xf]
    %v96 = vld [vmem:[#allocation2 + $0x74] sm:$0xf]
    %v97 = vld [vmem:[#allocation2 + $0x78] sm:$0xf]
    %v98 = vld [vmem:[#allocation2 + $0x7c] sm:$0xf]
    %v99 = vld [vmem:[#allocation2 + $0x80] sm:$0xf]
    %v100 = vld [vmem:[#allocation2 + $0x84] sm:$0xf]
    %v101 = vld [vmem:[#allocation2 + $0x88] sm:$0xf]
    %v102 = vld [vmem:[#allocation2 + $0x8c] sm:$0xf]
    %v103 = vld [vmem:[#allocation2 + $0x90] sm:$0xf]
    %v104 = vld [vmem:[#allocation2 + $0x94] sm:$0xf]
    %v105 = vld [vmem:[#allocation2 + $0x98] sm:$0xf]
    %v106 = vld [vmem:[#allocation2 + $0x9c] sm:$0xf]
    %v107 = vld [vmem:[#allocation2 + $0xa0] sm:$0xf]
    %v108 = vld [vmem:[#allocation2 + $0xa4] sm:$0xf]
    %v109 = vld [vmem:[#allocation2 + $0xa8] sm:$0xf]
    %v110 = vld [vmem:[#allocation2 + $0xac] sm:$0xf]
    %v111 = vld [vmem:[#allocation2 + $0xb0] sm:$0xf]
    %v112 = vld [vmem:[#allocation2 + $0xb4] sm:$0xf]
    %v113 = vld [vmem:[#allocation2 + $0xb8] sm:$0xf]
    %v114 = vld [vmem:[#allocation2 + $0xbc] sm:$0xf]
    %v115 = vld [vmem:[#allocation2 + $0xc0] sm:$0xf]
    %v116 = vld [vmem:[#allocation2 + $0xc4] sm:$0xf]
    %v117 = vld [vmem:[#allocation2 + $0xc8] sm:$0xf]
    %v118 = vld [vmem:[#allocation2 + $0xcc] sm:$0xf]
    %v119 = vld [vmem:[#allocation2 + $0xd0] sm:$0xf]
    %v120 = vld [vmem:[#allocation2 + $0xd4] sm:$0xf]
    %v121 = vld [vmem:[#allocation2 + $0xd8] sm:$0xf]
    %v122 = vld [vmem:[#allocation2 + $0xdc] sm:$0xf]
    %v123 = vld [vmem:[#allocation2 + $0xe0] sm:$0xf]
    %v124 = vld [vmem:[#allocation2 + $0xe4] sm:$0xf]
    %v125 = vld [vmem:[#allocation2 + $0xe8] sm:$0xf]
    %v126 = vld [vmem:[#allocation2 + $0xec] sm:$0xf]
    %v127 = vld [vmem:[#allocation2 + $0xf0] sm:$0xf]
    %v128 = vld [vmem:[#allocation2 + $0xf4] sm:$0xf]
    %v129 = vld [vmem:[#allocation2 + $0xf8] sm:$0xf]
    %v130 = vld [vmem:[#allocation2 + $0xfc] sm:$0xf]
    %v131 = vld [vmem:[#allocation2 + $0x100] sm:$0xf]
    %v132 = vld [vmem:[#allocation2 + $0x104] sm:$0xf]
    %v133 = vld [vmem:[#allocation2 + $0x108] sm:$0xf]
    %v134 = vld [vmem:[#allocation2 + $0x10c] sm:$0xf]
    %v135 = vld [vmem:[#allocation2 + $0x110] sm:$0xf]
    %v136 = vld [vmem:[#allocation2 + $0x114] sm:$0xf]
    %v137 = vld [vmem:[#allocation2 + $0x118] sm:$0xf]
    %v138 = vld [vmem:[#allocation2 + $0x11c] sm:$0xf]
    %v139 = vld [vmem:[#allocation2 + $0x120] sm:$0xf]
    %v140 = vld [vmem:[#allocation2 + $0x124] sm:$0xf]
    %v141 = vld [vmem:[#allocation2 + $0x128] sm:$0xf]
    %v142 = vld [vmem:[#allocation2 + $0x12c] sm:$0xf]
    %v143 = vld [vmem:[#allocation2 + $0x130] sm:$0xf]
    %v144 = vld [vmem:[#allocation2 + $0x134] sm:$0xf]
    %v145 = vld [vmem:[#allocation2 + $0x138] sm:$0xf]
    %v146 = vld [vmem:[#allocation2 + $0x13c] sm:$0xf]
    %v147 = vld [vmem:[#allocation2 + $0x140] sm:$0xf]
    %v148 = vld [vmem:[#allocation2 + $0x144] sm:$0xf]
    %v149 = vld [vmem:[#allocation2 + $0x148] sm:$0xf]
    %v150 = vld [vmem:[#allocation2 + $0x14c] sm:$0xf]
    %v151 = vld [vmem:[#allocation2 + $0x150] sm:$0xf]
    %v152 = vld [vmem:[#allocation2 + $0x154] sm:$0xf]
    %v153 = vld [vmem:[#allocation2 + $0x158] sm:$0xf]
    %v154 = vld [vmem:[#allocation2 + $0x15c] sm:$0xf]
    %v155 = vld [vmem:[#allocation2 + $0x160] sm:$0xf]
    %v156 = vld [vmem:[#allocation2 + $0x164] sm:$0xf]
    %v157 = vld [vmem:[#allocation2 + $0x168] sm:$0xf]
    %v158 = vld [vmem:[#allocation2 + $0x16c] sm:$0xf]
    %v159 = vld [vmem:[#allocation2 + $0x170] sm:$0xf]
    %v160 = vld [vmem:[#allocation2 + $0x174] sm:$0xf]
    %v161 = vld [vmem:[#allocation2 + $0x178] sm:$0xf]
    %v162 = vld [vmem:[#allocation2 + $0x17c] sm:$0xf]
    %v163 = vld [vmem:[#allocation2 + $0x180] sm:$0xf]
    %v164 = vld [vmem:[#allocation2 + $0x184] sm:$0xf]
    %v165 = vld [vmem:[#allocation2 + $0x188] sm:$0xf]
    %v166 = vld [vmem:[#allocation2 + $0x18c] sm:$0xf]
    %v167 = vld [vmem:[#allocation2 + $0x190] sm:$0xf]
    %v168 = vld [vmem:[#allocation2 + $0x194] sm:$0xf]
    %v169 = vld [vmem:[#allocation2 + $0x198] sm:$0xf]
    %v170 = vld [vmem:[#allocation2 + $0x19c] sm:$0xf]
    %v171 = vld [vmem:[#allocation2 + $0x1a0] sm:$0xf]
    %v172 = vld [vmem:[#allocation2 + $0x1a4] sm:$0xf]
    %v173 = vld [vmem:[#allocation2 + $0x1a8] sm:$0xf]
    %v174 = vld [vmem:[#allocation2 + $0x1ac] sm:$0xf]
    %v175 = vld [vmem:[#allocation2 + $0x1b0] sm:$0xf]
    %v176 = vld [vmem:[#allocation2 + $0x1b4] sm:$0xf]
    %v177 = vld [vmem:[#allocation2 + $0x1b8] sm:$0xf]
    %v178 = vld [vmem:[#allocation2 + $0x1bc] sm:$0xf]
    %v179 = vld [vmem:[#allocation2 + $0x1c0] sm:$0xf]
    %v180 = vld [vmem:[#allocation2 + $0x1c4] sm:$0xf]
    %v181 = vld [vmem:[#allocation2 + $0x1c8] sm:$0xf]
    %v182 = vld [vmem:[#allocation2 + $0x1cc] sm:$0xf]
    %v183 = vld [vmem:[#allocation2 + $0x1d0] sm:$0xf]
    %v184 = vld [vmem:[#allocation2 + $0x1d4] sm:$0xf]
    %v185 = vld [vmem:[#allocation2 + $0x1d8] sm:$0xf]
    %v186 = vld [vmem:[#allocation2 + $0x1dc] sm:$0xf]
    %v187 = vld [vmem:[#allocation2 + $0x1e0] sm:$0xf]
    %v188 = vld [vmem:[#allocation2 + $0x1e4] sm:$0xf]
    %v189 = vld [vmem:[#allocation2 + $0x1e8] sm:$0xf]
    %v190 = vld [vmem:[#allocation2 + $0x1ec] sm:$0xf]
    %v191 = vld [vmem:[#allocation2 + $0x1f0] sm:$0xf]
    %v192 = vld [vmem:[#allocation2 + $0x1f4] sm:$0xf]
    %v193 = vld [vmem:[#allocation2 + $0x1f8] sm:$0xf]
    %v194 = vld [vmem:[#allocation2 + $0x1fc] sm:$0xf]
    %v195 = vld [vmem:[%s2] sm:$0x1]
    %v197 = vlaneseq
    %v198 = vshrl.u32 %v197, 7
    %v199 = vsub.s32 0, %v198
    %v200 = vrot.slane %v195, %v199
    %v330 = vunpack.c.l.b16 %v67
    %v331 = vunpack.c.l.b16 %v68
    %v332 = vunpack.c.l.b16 %v69
    %v333 = vunpack.c.l.b16 %v70
    %v334 = vunpack.c.l.b16 %v71
    %v335 = vunpack.c.l.b16 %v72
    %v336 = vunpack.c.l.b16 %v73
    %v337 = vunpack.c.l.b16 %v74
    %v338 = vunpack.c.l.b16 %v75
    %v339 = vunpack.c.l.b16 %v76
    %v340 = vunpack.c.l.b16 %v77
    %v341 = vunpack.c.l.b16 %v78
    %v342 = vunpack.c.l.b16 %v79
    %v343 = vunpack.c.l.b16 %v80
    %v344 = vunpack.c.l.b16 %v81
    %v345 = vunpack.c.l.b16 %v82
    %v346 = vunpack.c.l.b16 %v83
    %v347 = vunpack.c.l.b16 %v84
    %v348 = vunpack.c.l.b16 %v85
    %v349 = vunpack.c.l.b16 %v86
    %v350 = vunpack.c.l.b16 %v87
    %v351 = vunpack.c.l.b16 %v88
    %v352 = vunpack.c.l.b16 %v89
    %v353 = vunpack.c.l.b16 %v90
    %v354 = vunpack.c.l.b16 %v91
    %v355 = vunpack.c.l.b16 %v92
    %v356 = vunpack.c.l.b16 %v93
    %v357 = vunpack.c.l.b16 %v94
    %v358 = vunpack.c.l.b16 %v95
    %v359 = vunpack.c.l.b16 %v96
    %v360 = vunpack.c.l.b16 %v97
    %v361 = vunpack.c.l.b16 %v98
    %v362 = vunpack.c.l.b16 %v99
    %v363 = vunpack.c.l.b16 %v100
    %v364 = vunpack.c.l.b16 %v101
    %v365 = vunpack.c.l.b16 %v102
    %v366 = vunpack.c.l.b16 %v103
    %v367 = vunpack.c.l.b16 %v104
    %v368 = vunpack.c.l.b16 %v105
    %v369 = vunpack.c.l.b16 %v106
    %v370 = vunpack.c.l.b16 %v107
    %v371 = vunpack.c.l.b16 %v108
    %v372 = vunpack.c.l.b16 %v109
    %v373 = vunpack.c.l.b16 %v110
    %v374 = vunpack.c.l.b16 %v111
    %v375 = vunpack.c.l.b16 %v112
    %v376 = vunpack.c.l.b16 %v113
    %v377 = vunpack.c.l.b16 %v114
    %v378 = vunpack.c.l.b16 %v115
    %v379 = vunpack.c.l.b16 %v116
    %v380 = vunpack.c.l.b16 %v117
    %v381 = vunpack.c.l.b16 %v118
    %v382 = vunpack.c.l.b16 %v119
    %v383 = vunpack.c.l.b16 %v120
    %v384 = vunpack.c.l.b16 %v121
    %v385 = vunpack.c.l.b16 %v122
    %v386 = vunpack.c.l.b16 %v123
    %v387 = vunpack.c.l.b16 %v124
    %v388 = vunpack.c.l.b16 %v125
    %v389 = vunpack.c.l.b16 %v126
    %v390 = vunpack.c.l.b16 %v127
    %v391 = vunpack.c.l.b16 %v128
    %v392 = vunpack.c.l.b16 %v129
    %v393 = vunpack.c.l.b16 %v130
    %v394 = vunpack.c.l.b16 %v131
    %v395 = vunpack.c.l.b16 %v132
    %v396 = vunpack.c.l.b16 %v133
    %v397 = vunpack.c.l.b16 %v134
    %v398 = vunpack.c.l.b16 %v135
    %v399 = vunpack.c.l.b16 %v136
    %v400 = vunpack.c.l.b16 %v137
    %v401 = vunpack.c.l.b16 %v138
    %v402 = vunpack.c.l.b16 %v139
    %v403 = vunpack.c.l.b16 %v140
    %v404 = vunpack.c.l.b16 %v141
    %v405 = vunpack.c.l.b16 %v142
    %v406 = vunpack.c.l.b16 %v143
    %v407 = vunpack.c.l.b16 %v144
    %v408 = vunpack.c.l.b16 %v145
    %v409 = vunpack.c.l.b16 %v146
    %v410 = vunpack.c.l.b16 %v147
    %v411 = vunpack.c.l.b16 %v148
    %v412 = vunpack.c.l.b16 %v149
    %v413 = vunpack.c.l.b16 %v150
    %v414 = vunpack.c.l.b16 %v151
    %v415 = vunpack.c.l.b16 %v152
    %v416 = vunpack.c.l.b16 %v153
    %v417 = vunpack.c.l.b16 %v154
    %v418 = vunpack.c.l.b16 %v155
    %v419 = vunpack.c.l.b16 %v156
    %v420 = vunpack.c.l.b16 %v157
    %v421 = vunpack.c.l.b16 %v158
    %v422 = vunpack.c.l.b16 %v159
    %v423 = vunpack.c.l.b16 %v160
    %v424 = vunpack.c.l.b16 %v161
    %v425 = vunpack.c.l.b16 %v162
    %v426 = vunpack.c.l.b16 %v163
    %v427 = vunpack.c.l.b16 %v164
    %v428 = vunpack.c.l.b16 %v165
    %v429 = vunpack.c.l.b16 %v166
    %v430 = vunpack.c.l.b16 %v167
    %v431 = vunpack.c.l.b16 %v168
    %v432 = vunpack.c.l.b16 %v169
    %v433 = vunpack.c.l.b16 %v170
    %v434 = vunpack.c.l.b16 %v171
    %v435 = vunpack.c.l.b16 %v172
    %v436 = vunpack.c.l.b16 %v173
    %v437 = vunpack.c.l.b16 %v174
    %v438 = vunpack.c.l.b16 %v175
    %v439 = vunpack.c.l.b16 %v176
    %v440 = vunpack.c.l.b16 %v177
    %v441 = vunpack.c.l.b16 %v178
    %v442 = vunpack.c.l.b16 %v179
    %v443 = vunpack.c.l.b16 %v180
    %v444 = vunpack.c.l.b16 %v181
    %v445 = vunpack.c.l.b16 %v182
    %v446 = vunpack.c.l.b16 %v183
    %v447 = vunpack.c.l.b16 %v184
    %v448 = vunpack.c.l.b16 %v185
    %v449 = vunpack.c.l.b16 %v186
    %v450 = vunpack.c.l.b16 %v187
    %v451 = vunpack.c.l.b16 %v188
    %v452 = vunpack.c.l.b16 %v189
    %v453 = vunpack.c.l.b16 %v190
    %v454 = vunpack.c.l.b16 %v191
    %v455 = vunpack.c.l.b16 %v192
    %v456 = vunpack.c.l.b16 %v193
    %v457 = vunpack.c.l.b16 %v194
    %v458 = vpack.c.b16 %v331, %v330
    %v459 = vpack.c.b16 %v333, %v332
    %v460 = vpack.c.b16 %v335, %v334
    %v461 = vpack.c.b16 %v337, %v336
    %v462 = vpack.c.b16 %v339, %v338
    %v463 = vpack.c.b16 %v341, %v340
    %v464 = vpack.c.b16 %v343, %v342
    %v465 = vpack.c.b16 %v345, %v344
    %v466 = vpack.c.b16 %v347, %v346
    %v467 = vpack.c.b16 %v349, %v348
    %v468 = vpack.c.b16 %v351, %v350
    %v469 = vpack.c.b16 %v353, %v352
    %v470 = vpack.c.b16 %v355, %v354
    %v471 = vpack.c.b16 %v357, %v356
    %v472 = vpack.c.b16 %v359, %v358
    %v473 = vpack.c.b16 %v361, %v360
    %v474 = vpack.c.b16 %v363, %v362
    %v475 = vpack.c.b16 %v365, %v364
    %v476 = vpack.c.b16 %v367, %v366
    %v477 = vpack.c.b16 %v369, %v368
    %v478 = vpack.c.b16 %v371, %v370
    %v479 = vpack.c.b16 %v373, %v372
    %v480 = vpack.c.b16 %v375, %v374
    %v481 = vpack.c.b16 %v377, %v376
    %v482 = vpack.c.b16 %v379, %v378
    %v483 = vpack.c.b16 %v381, %v380
    %v484 = vpack.c.b16 %v383, %v382
    %v485 = vpack.c.b16 %v385, %v384
    %v486 = vpack.c.b16 %v387, %v386
    %v487 = vpack.c.b16 %v389, %v388
    %v488 = vpack.c.b16 %v391, %v390
    %v489 = vpack.c.b16 %v393, %v392
    %v490 = vpack.c.b16 %v395, %v394
    %v491 = vpack.c.b16 %v397, %v396
    %v492 = vpack.c.b16 %v399, %v398
    %v493 = vpack.c.b16 %v401, %v400
    %v494 = vpack.c.b16 %v403, %v402
    %v495 = vpack.c.b16 %v405, %v404
    %v496 = vpack.c.b16 %v407, %v406
    %v497 = vpack.c.b16 %v409, %v408
    %v498 = vpack.c.b16 %v411, %v410
    %v499 = vpack.c.b16 %v413, %v412
    %v500 = vpack.c.b16 %v415, %v414
    %v501 = vpack.c.b16 %v417, %v416
    %v502 = vpack.c.b16 %v419, %v418
    %v503 = vpack.c.b16 %v421, %v420
    %v504 = vpack.c.b16 %v423, %v422
    %v505 = vpack.c.b16 %v425, %v424
    %v506 = vpack.c.b16 %v427, %v426
    %v507 = vpack.c.b16 %v429, %v428
    %v508 = vpack.c.b16 %v431, %v430
    %v509 = vpack.c.b16 %v433, %v432
    %v510 = vpack.c.b16 %v435, %v434
    %v511 = vpack.c.b16 %v437, %v436
    %v512 = vpack.c.b16 %v439, %v438
    %v513 = vpack.c.b16 %v441, %v440
    %v514 = vpack.c.b16 %v443, %v442
    %v515 = vpack.c.b16 %v445, %v444
    %v516 = vpack.c.b16 %v447, %v446
    %v517 = vpack.c.b16 %v449, %v448
    %v518 = vpack.c.b16 %v451, %v450
    %v519 = vpack.c.b16 %v453, %v452
    %v520 = vpack.c.b16 %v455, %v454
    %v521 = vpack.c.b16 %v457, %v456
    %586 = vmatprep.subr.bf16.mxu0 0
    %587 = vmatpush1.bf16.msra.mxu0 %v465
    %588 = vmatprep.subr.bf16.mxu0 0
    %589 = vmatpush1.bf16.msra.mxu0 %v464
    %590 = vmatprep.subr.bf16.mxu0 0
    %591 = vmatpush1.bf16.msra.mxu0 %v463
    %592 = vmatprep.subr.bf16.mxu0 0
    %593 = vmatpush1.bf16.msra.mxu0 %v462
    %594 = vmatprep.subr.bf16.mxu0 0
    %595 = vmatpush1.bf16.msra.mxu0 %v461
    %596 = vmatprep.subr.bf16.mxu0 0
    %597 = vmatpush1.bf16.msra.mxu0 %v460
    %598 = vmatprep.subr.bf16.mxu0 0
    %599 = vmatpush1.bf16.msra.mxu0 %v459
    %600 = vmatprep.subr.bf16.mxu0 0
    %601 = vmatpush1.bf16.msra.mxu0 %v458
    %602 = vmatprep.subr.bf16.mxu0 0
    %603 = vmatpush2.bf16.msra.mxu0 %v473
    %604 = vmatprep.subr.bf16.mxu0 0
    %605 = vmatpush2.bf16.msra.mxu0 %v472
    %606 = vmatprep.subr.bf16.mxu0 0
    %607 = vmatpush2.bf16.msra.mxu0 %v471
    %608 = vmatprep.subr.bf16.mxu0 0
    %609 = vmatpush2.bf16.msra.mxu0 %v470
    %610 = vmatprep.subr.bf16.mxu0 0
    %611 = vmatpush2.bf16.msra.mxu0 %v469
    %612 = vmatprep.subr.bf16.mxu0 0
    %613 = vmatpush2.bf16.msra.mxu0 %v468
    %614 = vmatprep.subr.bf16.mxu0 0
    %615 = vmatpush2.bf16.msra.mxu0 %v467
    %616 = vmatprep.subr.bf16.mxu0 0
    %617 = vmatpush2.bf16.msra.mxu0 %v466
    %618 = vmatprep.mubr.bf16.mxu0 %v60
    %619 = vmatmul.mubr.bf16.gmra.mxu0 %v59
    %v620 = vpop.f32.mrf.mxu0
    %v621 = vadd.f32 %v200, %v620
    %v622 = vpop.f32.mrf.mxu0
    %v623 = vpop.f32.mrf.mxu0
    %v624 = vadd.f32 %v200, %v623
    %v625 = vpop.f32.mrf.mxu0
    %626 = vdwg.mxu0
    %627 = vmatprep.subr.bf16.mxu0 0
    %628 = vmatpush1.bf16.msra.mxu0 %v481
    %629 = vmatprep.subr.bf16.mxu0 0
    %630 = vmatpush1.bf16.msra.mxu0 %v480
    %631 = vmatprep.subr.bf16.mxu0 0
    %632 = vmatpush1.bf16.msra.mxu0 %v479
    %633 = vmatprep.subr.bf16.mxu0 0
    %634 = vmatpush1.bf16.msra.mxu0 %v478
    %635 = vmatprep.subr.bf16.mxu0 0
    %636 = vmatpush1.bf16.msra.mxu0 %v477
    %637 = vmatprep.subr.bf16.mxu0 0
    %638 = vmatpush1.bf16.msra.mxu0 %v476
    %639 = vmatprep.subr.bf16.mxu0 0
    %640 = vmatpush1.bf16.msra.mxu0 %v475
    %641 = vmatprep.subr.bf16.mxu0 0
    %642 = vmatpush1.bf16.msra.mxu0 %v474
    %643 = vmatprep.subr.bf16.mxu0 0
    %644 = vmatpush2.bf16.msra.mxu0 %v489
    %645 = vmatprep.subr.bf16.mxu0 0
    %646 = vmatpush2.bf16.msra.mxu0 %v488
    %647 = vmatprep.subr.bf16.mxu0 0
    %648 = vmatpush2.bf16.msra.mxu0 %v487
    %649 = vmatprep.subr.bf16.mxu0 0
    %650 = vmatpush2.bf16.msra.mxu0 %v486
    %651 = vmatprep.subr.bf16.mxu0 0
    %652 = vmatpush2.bf16.msra.mxu0 %v485
    %653 = vmatprep.subr.bf16.mxu0 0
    %654 = vmatpush2.bf16.msra.mxu0 %v484
    %655 = vmatprep.subr.bf16.mxu0 0
    %656 = vmatpush2.bf16.msra.mxu0 %v483
    %657 = vmatprep.subr.bf16.mxu0 0
    %658 = vmatpush2.bf16.msra.mxu0 %v482
    %659 = vmatprep.mubr.bf16.mxu0 %v62
    %660 = vmatmul.mubr.bf16.gmra.mxu0 %v61
    %v661 = vpop.f32.mrf.mxu0
    %v662 = vadd.f32 %v621, %v661
    %v663 = vpop.f32.mrf.mxu0
    %v664 = vpop.f32.mrf.mxu0
    %v665 = vadd.f32 %v624, %v664
    %v666 = vpop.f32.mrf.mxu0
    %667 = vdwg.mxu0
    %668 = vmatprep.subr.bf16.mxu0 0
    %669 = vmatpush1.bf16.msra.mxu0 %v497
    %670 = vmatprep.subr.bf16.mxu0 0
    %671 = vmatpush1.bf16.msra.mxu0 %v496
    %672 = vmatprep.subr.bf16.mxu0 0
    %673 = vmatpush1.bf16.msra.mxu0 %v495
    %674 = vmatprep.subr.bf16.mxu0 0
    %675 = vmatpush1.bf16.msra.mxu0 %v494
    %676 = vmatprep.subr.bf16.mxu0 0
    %677 = vmatpush1.bf16.msra.mxu0 %v493
    %678 = vmatprep.subr.bf16.mxu0 0
    %679 = vmatpush1.bf16.msra.mxu0 %v492
    %680 = vmatprep.subr.bf16.mxu0 0
    %681 = vmatpush1.bf16.msra.mxu0 %v491
    %682 = vmatprep.subr.bf16.mxu0 0
    %683 = vmatpush1.bf16.msra.mxu0 %v490
    %684 = vmatprep.subr.bf16.mxu0 0
    %685 = vmatpush2.bf16.msra.mxu0 %v505
    %686 = vmatprep.subr.bf16.mxu0 0
    %687 = vmatpush2.bf16.msra.mxu0 %v504
    %688 = vmatprep.subr.bf16.mxu0 0
    %689 = vmatpush2.bf16.msra.mxu0 %v503
    %690 = vmatprep.subr.bf16.mxu0 0
    %691 = vmatpush2.bf16.msra.mxu0 %v502
    %692 = vmatprep.subr.bf16.mxu0 0
    %693 = vmatpush2.bf16.msra.mxu0 %v501
    %694 = vmatprep.subr.bf16.mxu0 0
    %695 = vmatpush2.bf16.msra.mxu0 %v500
    %696 = vmatprep.subr.bf16.mxu0 0
    %697 = vmatpush2.bf16.msra.mxu0 %v499
    %698 = vmatprep.subr.bf16.mxu0 0
    %699 = vmatpush2.bf16.msra.mxu0 %v498
    %700 = vmatprep.mubr.bf16.mxu0 %v64
    %701 = vmatmul.mubr.bf16.gmra.mxu0 %v63
    %v702 = vpop.f32.mrf.mxu0
    %v703 = vadd.f32 %v662, %v702
    %v704 = vpop.f32.mrf.mxu0
    %v705 = vpop.f32.mrf.mxu0
    %v706 = vadd.f32 %v665, %v705
    %v707 = vpop.f32.mrf.mxu0
    %708 = vdwg.mxu0
    %709 = vmatprep.subr.bf16.mxu0 0
    %710 = vmatpush1.bf16.msra.mxu0 %v513
    %711 = vmatprep.subr.bf16.mxu0 0
    %712 = vmatpush1.bf16.msra.mxu0 %v512
    %713 = vmatprep.subr.bf16.mxu0 0
    %714 = vmatpush1.bf16.msra.mxu0 %v511
    %715 = vmatprep.subr.bf16.mxu0 0
    %716 = vmatpush1.bf16.msra.mxu0 %v510
    %717 = vmatprep.subr.bf16.mxu0 0
    %718 = vmatpush1.bf16.msra.mxu0 %v509
    %719 = vmatprep.subr.bf16.mxu0 0
    %720 = vmatpush1.bf16.msra.mxu0 %v508
    %721 = vmatprep.subr.bf16.mxu0 0
    %722 = vmatpush1.bf16.msra.mxu0 %v507
    %723 = vmatprep.subr.bf16.mxu0 0
    %724 = vmatpush1.bf16.msra.mxu0 %v506
    %725 = vmatprep.subr.bf16.mxu0 0
    %726 = vmatpush2.bf16.msra.mxu0 %v521
    %727 = vmatprep.subr.bf16.mxu0 0
    %728 = vmatpush2.bf16.msra.mxu0 %v520
    %729 = vmatprep.subr.bf16.mxu0 0
    %730 = vmatpush2.bf16.msra.mxu0 %v519
    %731 = vmatprep.subr.bf16.mxu0 0
    %732 = vmatpush2.bf16.msra.mxu0 %v518
    %733 = vmatprep.subr.bf16.mxu0 0
    %734 = vmatpush2.bf16.msra.mxu0 %v517
    %735 = vmatprep.subr.bf16.mxu0 0
    %736 = vmatpush2.bf16.msra.mxu0 %v516
    %737 = vmatprep.subr.bf16.mxu0 0
    %738 = vmatpush2.bf16.msra.mxu0 %v515
    %739 = vmatprep.subr.bf16.mxu0 0
    %740 = vmatpush2.bf16.msra.mxu0 %v514
    %741 = vmatprep.mubr.bf16.mxu0 %v66
    %742 = vmatmul.mubr.bf16.gmra.mxu0 %v65
    %v743 = vpop.f32.mrf.mxu0
    %v744 = vadd.f32 %v703, %v743
    %v745 = vpop.f32.mrf.mxu0
    %v746 = vpop.f32.mrf.mxu0
    %v747 = vadd.f32 %v706, %v746
    %v748 = vpop.f32.mrf.mxu0
    %749 = vdwg.mxu0
    %v750 = vmax.f32 %v744, 0.0
    %v751 = vmax.f32 %v747, 0.0
    %v752 = vpack.c.bf16 %v751, %v750
    %v753 = vld [vmem:[%s3] sm:$0xf]
    %v754 = vld [vmem:[%s3 + $0x4] sm:$0xf]
    %v755 = vld [vmem:[%s3 + $0x8] sm:$0xf]
    %v756 = vld [vmem:[%s3 + $0xc] sm:$0xf]
    %v757 = vld [vmem:[%s3 + $0x10] sm:$0xf]
    %v758 = vld [vmem:[%s3 + $0x14] sm:$0xf]
    %v759 = vld [vmem:[%s3 + $0x18] sm:$0xf]
    %v760 = vld [vmem:[%s3 + $0x1c] sm:$0xf]
    %v761 = vld [vmem:[%s3 + $0x20] sm:$0xf]
    %v762 = vld [vmem:[%s3 + $0x24] sm:$0xf]
    %v763 = vld [vmem:[%s3 + $0x28] sm:$0xf]
    %v764 = vld [vmem:[%s3 + $0x2c] sm:$0xf]
    %v765 = vld [vmem:[%s3 + $0x30] sm:$0xf]
    %v766 = vld [vmem:[%s3 + $0x34] sm:$0xf]
    %v767 = vld [vmem:[%s3 + $0x38] sm:$0xf]
    %v768 = vld [vmem:[%s3 + $0x3c] sm:$0xf]
    %v769 = vld [vmem:[%s4] sm:$0x1]
    %v771 = vlaneseq
    %v772 = vshrl.u32 %v771, 7
    %v773 = vsub.s32 0, %v772
    %v774 = vrot.slane %v769, %v773
    %v792 = vunpack.c.l.b16 %v753
    %v793 = vunpack.c.l.b16 %v754
    %v794 = vunpack.c.l.b16 %v755
    %v795 = vunpack.c.l.b16 %v756
    %v796 = vunpack.c.l.b16 %v757
    %v797 = vunpack.c.l.b16 %v758
    %v798 = vunpack.c.l.b16 %v759
    %v799 = vunpack.c.l.b16 %v760
    %v800 = vunpack.c.l.b16 %v761
    %v801 = vunpack.c.l.b16 %v762
    %v802 = vunpack.c.l.b16 %v763
    %v803 = vunpack.c.l.b16 %v764
    %v804 = vunpack.c.l.b16 %v765
    %v805 = vunpack.c.l.b16 %v766
    %v806 = vunpack.c.l.b16 %v767
    %v807 = vunpack.c.l.b16 %v768
    %v808 = vpack.c.b16 %v793, %v792
    %v809 = vpack.c.b16 %v795, %v794
    %v810 = vpack.c.b16 %v797, %v796
    %v811 = vpack.c.b16 %v799, %v798
    %v812 = vpack.c.b16 %v801, %v800
    %v813 = vpack.c.b16 %v803, %v802
    %v814 = vpack.c.b16 %v805, %v804
    %v815 = vpack.c.b16 %v807, %v806
    %824 = vmatprep.subr.bf16.mxu0 0
    %825 = vmatpush1.bf16.msra.mxu0 %v815
    %826 = vmatprep.subr.bf16.mxu0 0
    %827 = vmatpush1.bf16.msra.mxu0 %v814
    %828 = vmatprep.subr.bf16.mxu0 0
    %829 = vmatpush1.bf16.msra.mxu0 %v813
    %830 = vmatprep.subr.bf16.mxu0 0
    %831 = vmatpush1.bf16.msra.mxu0 %v812
    %832 = vmatprep.subr.bf16.mxu0 0
    %833 = vmatpush1.bf16.msra.mxu0 %v811
    %834 = vmatprep.subr.bf16.mxu0 0
    %835 = vmatpush1.bf16.msra.mxu0 %v810
    %836 = vmatprep.subr.bf16.mxu0 0
    %837 = vmatpush1.bf16.msra.mxu0 %v809
    %838 = vmatprep.subr.bf16.mxu0 0
    %839 = vmatpush1.bf16.msra.mxu0 %v808
    %840 = vmatprep.subr.bf16.mxu0 0
    %841 = vmatpush2.bf16.msra.mxu0 0
    %842 = vmatprep.subr.bf16.mxu0 0
    %843 = vmatpush2.bf16.msra.mxu0 0
    %844 = vmatprep.subr.bf16.mxu0 0
    %845 = vmatpush2.bf16.msra.mxu0 0
    %846 = vmatprep.subr.bf16.mxu0 0
    %847 = vmatpush2.bf16.msra.mxu0 0
    %848 = vmatprep.subr.bf16.mxu0 0
    %849 = vmatpush2.bf16.msra.mxu0 0
    %850 = vmatprep.subr.bf16.mxu0 0
    %851 = vmatpush2.bf16.msra.mxu0 0
    %852 = vmatprep.subr.bf16.mxu0 0
    %853 = vmatpush2.bf16.msra.mxu0 0
    %854 = vmatprep.subr.bf16.mxu0 0
    %855 = vmatpush2.bf16.msra.mxu0 0
    %856 = vmatprep.mubr.bf16.mxu0 0
    %857 = vmatmul.mubr.bf16.gmra.mxu0 %v752
    %v858 = vpop.f32.mrf.mxu0
    %v859 = vadd.f32 %v774, %v858
    %v860 = vpop.f32.mrf.mxu0
    %v861 = vpop.f32.mrf.mxu0
    %v862 = vadd.f32 %v774, %v861
    %v863 = vpop.f32.mrf.mxu0
    %864 = vdwg.mxu0
    %865 = vst [vmem:[%s7] sm:$0xff] %v859
    %866 = vst [vmem:[%s7 + $0x8] sm:$0xff] %v862
    %v867 = vpack.c.bf16 %v862, %v859
    %v868 = vld [vmem:[%s5] sm:$0xf]
    %v869 = vld [vmem:[%s5 + $0x4] sm:$0xf]
    %v870 = vld [vmem:[%s5 + $0x8] sm:$0xf]
    %v871 = vld [vmem:[%s5 + $0xc] sm:$0xf]
    %v872 = vld [vmem:[%s5 + $0x10] sm:$0xf]
    %v873 = vld [vmem:[%s5 + $0x14] sm:$0xf]
    %v874 = vld [vmem:[%s5 + $0x18] sm:$0xf]
    %v875 = vld [vmem:[%s5 + $0x1c] sm:$0xf]
    %v876 = vld [vmem:[%s5 + $0x20] sm:$0xf]
    %v877 = vld [vmem:[%s5 + $0x24] sm:$0xf]
    %v878 = vld [vmem:[%s5 + $0x28] sm:$0xf]
    %v879 = vld [vmem:[%s5 + $0x2c] sm:$0xf]
    %v880 = vld [vmem:[%s5 + $0x30] sm:$0xf]
    %v881 = vld [vmem:[%s5 + $0x34] sm:$0xf]
    %v882 = vld [vmem:[%s5 + $0x38] sm:$0xf]
    %v883 = vld [vmem:[%s5 + $0x3c] sm:$0xf]
    %v900 = vunpack.c.l.b16 %v868
    %v901 = vunpack.c.l.b16 %v869
    %v902 = vunpack.c.l.b16 %v870
    %v903 = vunpack.c.l.b16 %v871
    %v904 = vunpack.c.l.b16 %v872
    %v905 = vunpack.c.l.b16 %v873
    %v906 = vunpack.c.l.b16 %v874
    %v907 = vunpack.c.l.b16 %v875
    %v908 = vunpack.c.l.b16 %v876
    %v909 = vunpack.c.l.b16 %v877
    %v910 = vunpack.c.l.b16 %v878
    %v911 = vunpack.c.l.b16 %v879
    %v912 = vunpack.c.l.b16 %v880
    %v913 = vunpack.c.l.b16 %v881
    %v914 = vunpack.c.l.b16 %v882
    %v915 = vunpack.c.l.b16 %v883
    %v916 = vpack.c.b16 %v901, %v900
    %v917 = vpack.c.b16 %v903, %v902
    %v918 = vpack.c.b16 %v905, %v904
    %v919 = vpack.c.b16 %v907, %v906
    %v920 = vpack.c.b16 %v909, %v908
    %v921 = vpack.c.b16 %v911, %v910
    %v922 = vpack.c.b16 %v913, %v912
    %v923 = vpack.c.b16 %v915, %v914
    %932 = vmatprep.subr.bf16.mxu0 0
    %933 = vmatpush1.bf16.msra.mxu0 %v923
    %934 = vmatprep.subr.bf16.mxu0 0
    %935 = vmatpush1.bf16.msra.mxu0 %v922
    %936 = vmatprep.subr.bf16.mxu0 0
    %937 = vmatpush1.bf16.msra.mxu0 %v921
    %938 = vmatprep.subr.bf16.mxu0 0
    %939 = vmatpush1.bf16.msra.mxu0 %v920
    %940 = vmatprep.subr.bf16.mxu0 0
    %941 = vmatpush1.bf16.msra.mxu0 %v919
    %942 = vmatprep.subr.bf16.mxu0 0
    %943 = vmatpush1.bf16.msra.mxu0 %v918
    %944 = vmatprep.subr.bf16.mxu0 0
    %945 = vmatpush1.bf16.msra.mxu0 %v917
    %946 = vmatprep.subr.bf16.mxu0 0
    %947 = vmatpush1.bf16.msra.mxu0 %v916
    %948 = vmatprep.subr.bf16.mxu0 0
    %949 = vmatpush2.bf16.msra.mxu0 0
    %950 = vmatprep.subr.bf16.mxu0 0
    %951 = vmatpush2.bf16.msra.mxu0 0
    %952 = vmatprep.subr.bf16.mxu0 0
    %953 = vmatpush2.bf16.msra.mxu0 0
    %954 = vmatprep.subr.bf16.mxu0 0
    %955 = vmatpush2.bf16.msra.mxu0 0
    %956 = vmatprep.subr.bf16.mxu0 0
    %957 = vmatpush2.bf16.msra.mxu0 0
    %958 = vmatprep.subr.bf16.mxu0 0
    %959 = vmatpush2.bf16.msra.mxu0 0
    %960 = vmatprep.subr.bf16.mxu0 0
    %961 = vmatpush2.bf16.msra.mxu0 0
    %962 = vmatprep.subr.bf16.mxu0 0
    %963 = vmatpush2.bf16.msra.mxu0 0
    %964 = vmatprep.mubr.bf16.mxu0 0
    %965 = vmatmul.mubr.bf16.gmra.mxu0 %v867
    %v966 = vpop.f32.mrf.mxu0
    %v967 = vadd.f32 0.0, %v966
    %v968 = vpop.f32.mrf.mxu0
    %v969 = vpop.f32.mrf.mxu0
    %v970 = vadd.f32 0.0, %v969
    %v971 = vpop.f32.mrf.mxu0
    %972 = vdwg.mxu0
    %v973 = vunpack.c.l.bf16 %v867
    %v974 = vunpack.c.h.bf16 %v867
    %v975 = vmul.f32 %v973, %v973
    %v976 = vmul.f32 %v974, %v974
    %977 = vadd.xlane.f32.xlu0 %v975
    %v978 = vpop.xlane.xlu0 %977
    %979 = vadd.xlane.f32.xlu0 %v976
    %v980 = vpop.xlane.xlu0 %979
    %v981 = vld [vmem:[%s6] sm:$0x1]
    %v983 = vlaneseq
    %v984 = vshrl.u32 %v983, 7
    %v985 = vsub.s32 0, %v984
    %v986 = vrot.slane %v981, %v985
    %v988 = vadd.f32 %v978, %v986
    %v989 = vadd.f32 %v980, %v986
    %v990 = vmul.f32 %v967, 2.0
    %v991 = vmul.f32 %v970, 2.0
    %v992 = vsub.f32 %v988, %v990
    %v993 = vsub.f32 %v989, %v991
    %v994 = vmax.f32 %v992, 0.0
    %v995 = vmax.f32 %v993, 0.0
    %v996 = vrsqrt.pop %v994
    %v997 = vmul.f32 %v994, %v996
    %vm998 = vcmp.eq.f32.partialorder %v994, inf
    %v999 = vsel %vm998, %v994, %v997
    %vm1000 = vcmp.eq.f32.partialorder %v994, 0.0
    %v1001 = vand.u32 %v994, 2147483648
    %v1002 = vsel %vm1000, %v1001, %v999
    %v1003 = vrsqrt.pop %v995
    %v1004 = vmul.f32 %v995, %v1003
    %vm1005 = vcmp.eq.f32.partialorder %v995, inf
    %v1006 = vsel %vm1005, %v995, %v1004
    %vm1007 = vcmp.eq.f32.partialorder %v995, 0.0
    %v1008 = vand.u32 %v995, 2147483648
    %v1009 = vsel %vm1007, %v1008, %v1006
    %v1010 = vsub.f32 0.0, %v1002
    %v1011 = vsub.f32 0.0, %v1009
    %1012 = vst [vmem:[%s8] sm:$0xff] %v1010
    %1013 = vst [vmem:[%s8 + $0x8] sm:$0xff] %v1011
    // Predicated region
    $region34: #{protonet_forward.1} parent=1 // pred_check
      _
    $region35: #{protonet_forward.1} parent=1 // pred_check_branch
      %1015 = sbr.rel (0) target = $region37
    $region36: #{protonet_forward.1} parent=1 // pred_region
      _
    $region37: #{protonet_forward.1} parent=1 // pred_fallthru
      _
    // Predicated region
    $region38: #{protonet_forward.1} parent=1 // pred_check
      _
    $region39: #{protonet_forward.1} parent=1 // pred_check_branch
      %1017 = sbr.rel (0) target = $region41
    $region40: #{protonet_forward.1} parent=1 // pred_region
      _
    $region41: #{protonet_forward.1} parent=1 // pred_fallthru
      _
    // Predicated region
    $region42: #{protonet_forward.1} parent=1 // pred_check
      _
    $region43: #{protonet_forward.1} parent=1 // pred_check_branch
      %1019 = sbr.rel (0) target = $region45
    $region44: #{protonet_forward.1} parent=1 // pred_region
      _
    $region45: #{protonet_forward.1} parent=1 // pred_fallthru
      _
    // Predicated region
    $region46: #{protonet_forward.1} parent=1 // pred_check
      _
    $region47: #{protonet_forward.1} parent=1 // pred_check_branch
      %1021 = sbr.rel (0) target = $region49
    $region48: #{protonet_forward.1} parent=1 // pred_region
      _
    $region49: #{protonet_forward.1} parent=1 // pred_fallthru
      _
    %1022 = vsyncpa [#allocation3], 1

</llo_original>
